<compile_context>
chip_gen: v6e
topology: v6e:2x2x1
jax: 0.10.0
libtpu: 0.0.40
codegen_flags: <defaults>
</compile_context>

<pallas_src>
import numpy as np
import jax
import jax.numpy as jnp
from jax import lax
from jax.experimental import pallas as pl
from jax.experimental.pallas import tpu as pltpu

SAMPLE_RATE = 16000
FRAME_LEN = 400                  # 25 ms @ 16 kHz
FRAME_SHIFT = 160                # 10 ms @ 16 kHz
PADDED_LEN = 512                 # round_to_power_of_two(400)
NUM_FFT_BINS = PADDED_LEN // 2   # 256 (kaldi mel banks), +1 zero column -> 257
NUM_FREQ = NUM_FFT_BINS + 1      # 257 rfft bins used
FREQ_PAD = 384                   # freq axis padded to a multiple of 128
NUM_MEL = 80
NUM_MEL_PAD = 128                # mel/output lane dim padded to 128
PREEMPH = 0.97
LOW_FREQ = 20.0
HIGH_FREQ = 0.5 * SAMPLE_RATE    # kaldi high_freq=0.0 -> Nyquist
LOG_EPS = 1.1920928955078125e-07 # torch.finfo(torch.float).eps
CMVN_EPS = 1e-10
TILE_FRAMES = 256                # frame tile (fits default scoped VMEM on v5e/v6e/v7x)


def _round_up(x, m):
    return ((x + m - 1) // m) * m


# ------------------------- Pallas kernels (hot path) -------------------------
def _make_fbank_kernel(tm, num_valid_frames):
    def kernel(frames_ref, dft_ref, mel_ref, logmel_ref, stats_ref):
        x = frames_ref[...]                                         # (tm, 512)
        # DC removal: mean over the 400 real samples (pad lanes are zero, so the
        # sum over 512 lanes is exact).  Pad lanes pick up -mean, but the folded
        # operator has zero rows there, so they contribute nothing downstream.
        mean = jnp.sum(x, axis=1, keepdims=True) * (1.0 / FRAME_LEN)
        x = x - mean
        # pre-emphasis (replicate pad) + Hamming window + zero-pad + rFFT(re|im)
        # are all folded into dft_ref -> ONE MXU matmul, K=512, N=768.
        y = jnp.dot(x, dft_ref[...], preferred_element_type=jnp.float32)
        # power spectrum + mel filterbank: (re^2+im^2)@mel == (y*y)@[mel; mel]
        mel_e = jnp.dot(y * y, mel_ref[...], preferred_element_type=jnp.float32)
        log_mel = jnp.log(jnp.maximum(mel_e, LOG_EPS))               # (tm, 128)
        logmel_ref[...] = log_mel

        # per-tile partial CMVN statistics over valid frames only
        row = (pl.program_id(0) * tm
               + lax.broadcasted_iota(jnp.int32, (tm, 1), 0))
        masked = jnp.where(row < num_valid_frames, log_mel, 0.0)
        s1 = jnp.sum(masked, axis=0, keepdims=True)                  # (1, 128)
        s2 = jnp.sum(masked * masked, axis=0, keepdims=True)         # (1, 128)
        stats_ref[...] = jnp.concatenate(
            [s1, s2, jnp.zeros((6, NUM_MEL_PAD), jnp.float32)], axis=0)

    return kernel


def _cmvn_kernel(logmel_ref, mean_ref, scale_ref, out_ref):
    out_ref[...] = (logmel_ref[...] - mean_ref[...]) * scale_ref[...]


# ------------------------- parameter construction (glue) ---------------------
def _mel_scale(freq):
    return 1127.0 * np.log(1.0 + freq / 700.0)


def _mel_banks_f64():
    # kaldi-compatible triangular mel filterbank, (NUM_FREQ, NUM_MEL) float64
    fft_bin_width = SAMPLE_RATE / PADDED_LEN
    mel_low = _mel_scale(LOW_FREQ)
    mel_high = _mel_scale(HIGH_FREQ)
    mel_delta = (mel_high - mel_low) / (NUM_MEL + 1)
    b = np.arange(NUM_MEL, dtype=np.float64)[:, None]
    left = mel_low + b * mel_delta
    center = left + mel_delta
    right = center + mel_delta
    mel = _mel_scale(fft_bin_width * np.arange(NUM_FFT_BINS, dtype=np.float64))[None, :]
    up = (mel - left) / (center - left)
    down = (right - mel) / (right - center)
    fb = np.maximum(0.0, np.minimum(up, down))        # (80, 256)
    fb = np.pad(fb, ((0, 0), (0, 1)))                 # kaldi pads one zero column
    return fb.T                                       # (257, 80)


def _build_mel_operator():
    fb = _mel_banks_f64()                                              # (257, 80)
    fb = np.pad(fb, ((0, FREQ_PAD - NUM_FREQ), (0, NUM_MEL_PAD - NUM_MEL)))
    return np.concatenate([fb, fb], axis=0).astype(np.float32)         # (768, 128)


def _build_dft_operator():
    # Linear map: DC-removed frame (512) -> [Re rFFT | Im rFFT] (768) of the
    # pre-emphasized, Hamming-windowed, zero-padded frame.
    w = 0.54 - 0.46 * np.cos(
        2.0 * np.pi * np.arange(FRAME_LEN, dtype=np.float64) / (FRAME_LEN - 1))
    P = np.zeros((PADDED_LEN, PADDED_LEN), dtype=np.float64)
    r = np.arange(FRAME_LEN)
    P[r, r] = w                                       # window * identity
    P[r[1:], r[1:] - 1] += -PREEMPH * w[1:]           # window * (-0.97 * x[n-1])
    P[0, 0] += -PREEMPH * w[0]                        # replicate pad: x[-1] := x[0]
    n = np.arange(PADDED_LEN, dtype=np.float64)[:, None]
    k = np.arange(NUM_FREQ, dtype=np.float64)[None, :]
    ang = 2.0 * np.pi * n * k / PADDED_LEN
    cos = np.pad(np.cos(ang), ((0, 0), (0, FREQ_PAD - NUM_FREQ)))
    sin = np.pad(-np.sin(ang), ((0, 0), (0, FREQ_PAD - NUM_FREQ)))
    D = np.concatenate([cos, sin], axis=1)            # (512, 768)
    return (P.T @ D).astype(np.float32)               # (512, 768)


# ------------------------- wrapper -------------------------------------------
def feature_extractor(waveform, tile_frames=TILE_FRAMES):
    """waveform: (1, num_samples) float32 -> (num_frames, NUM_MEL) float32."""
    wav = waveform[0].astype(jnp.float32)
    n = wav.shape[0]
    num_frames = 1 + (n - FRAME_LEN) // FRAME_SHIFT   # snip_edges=True

    tm = min(tile_frames, _round_up(num_frames, 8))
    t_pad = _round_up(num_frames, tm)
    num_tiles = t_pad // tm

    # framing (strided gather) — glue
    # TODO(synk): for long audio, DMA contiguous waveform spans per tile and frame
    # in-kernel to avoid the 2.5x gather expansion in HBM.
    idx = (jnp.arange(num_frames)[:, None] * FRAME_SHIFT
           + jnp.arange(FRAME_LEN)[None, :])
    frames = wav[idx]                                                   # (T, 400)
    frames = jnp.pad(frames, ((0, t_pad - num_frames),
                              (0, PADDED_LEN - FRAME_LEN)))             # (t_pad, 512)

    dft_op = jnp.asarray(_build_dft_operator())                         # (512, 768)
    mel_op = jnp.asarray(_build_mel_operator())                         # (768, 128)

    # ---- pass 1: fbank + per-tile partial CMVN statistics ----
    log_mel, stats = pl.pallas_call(
        _make_fbank_kernel(tm, num_frames),
        out_shape=(jax.ShapeDtypeStruct((t_pad, NUM_MEL_PAD), jnp.float32),
                   jax.ShapeDtypeStruct((num_tiles * 8, NUM_MEL_PAD), jnp.float32)),
        grid=(num_tiles,),
        in_specs=[
            pl.BlockSpec((tm, PADDED_LEN), lambda i: (i, 0)),            # frames tile
            pl.BlockSpec((PADDED_LEN, 2 * FREQ_PAD), lambda i: (0, 0)),  # fused DFT (resident)
            pl.BlockSpec((2 * FREQ_PAD, NUM_MEL_PAD), lambda i: (0, 0)), # mel bank (resident)
        ],
        out_specs=(pl.BlockSpec((tm, NUM_MEL_PAD), lambda i: (i, 0)),
                   pl.BlockSpec((8, NUM_MEL_PAD), lambda i: (i, 0))),
        compiler_params=pltpu.CompilerParams(
            dimension_semantics=("parallel",)),
    )(frames, dft_op, mel_op)

    # ---- tiny cross-tile reduction (num_tiles x 128 values) — glue ----
    parts = stats.reshape(num_tiles, 8, NUM_MEL_PAD)
    total = jnp.sum(parts[:, 0, :], axis=0)
    total_sq = jnp.sum(parts[:, 1, :], axis=0)
    t = jnp.float32(num_frames)
    mean = total / t
    # unbiased variance (torch.std default).  num_frames == 1 yields NaN, matching torch.
    var = jnp.maximum((total_sq - t * mean * mean) / (t - 1.0), 0.0)
    scale = 1.0 / (CMVN_EPS + jnp.sqrt(var))

    # ---- pass 2: normalize ----
    out = pl.pallas_call(
        _cmvn_kernel,
        out_shape=jax.ShapeDtypeStruct((t_pad, NUM_MEL_PAD), jnp.float32),
        grid=(num_tiles,),
        in_specs=[pl.BlockSpec((tm, NUM_MEL_PAD), lambda i: (i, 0)),
                  pl.BlockSpec((1, NUM_MEL_PAD), lambda i: (0, 0)),
                  pl.BlockSpec((1, NUM_MEL_PAD), lambda i: (0, 0))],
        out_specs=pl.BlockSpec((tm, NUM_MEL_PAD), lambda i: (i, 0)),
        compiler_params=pltpu.CompilerParams(
            dimension_semantics=("parallel",)),
    )(log_mel, mean.reshape(1, NUM_MEL_PAD), scale.reshape(1, NUM_MEL_PAD))

    return out[:num_frames, :NUM_MEL]


# ------------------------- NumPy float64 reference (sanity check) ------------
def _reference_np(waveform):
    wav = np.asarray(waveform[0], dtype=np.float64)
    num_frames = 1 + (wav.shape[0] - FRAME_LEN) // FRAME_SHIFT
    idx = (np.arange(num_frames)[:, None] * FRAME_SHIFT
           + np.arange(FRAME_LEN)[None, :])
    x = wav[idx]
    x = x - x.mean(axis=1, keepdims=True)
    prev = np.concatenate([x[:, :1], x[:, :-1]], axis=1)
    x = x - PREEMPH * prev
    w = 0.54 - 0.46 * np.cos(
        2.0 * np.pi * np.arange(FRAME_LEN, dtype=np.float64) / (FRAME_LEN - 1))
    x = x * w
    xp = np.pad(x, ((0, 0), (0, PADDED_LEN - FRAME_LEN)))
    power = np.abs(np.fft.rfft(xp, axis=1)) ** 2
    mel = power @ _mel_banks_f64()
    y = np.log(np.maximum(mel, LOG_EPS))
    mu = y.mean(axis=0, keepdims=True)
    c = y - mu
    std = np.sqrt((c * c).sum(axis=0, keepdims=True) / (num_frames - 1))
    return (c / (CMVN_EPS + std)).astype(np.float32)


if __name__ == "__main__":
    key = jax.random.PRNGKey(0)
    num_samples = FRAME_LEN + 7 * FRAME_SHIFT            # -> 8 frames
    waveform = jax.random.normal(key, (1, num_samples), dtype=jnp.float32)

    feats = jax.block_until_ready(feature_extractor(waveform))

    assert feats.shape == (8, NUM_MEL) and feats.dtype == jnp.float32
    assert bool(jnp.all(jnp.isfinite(feats)))
    ref = _reference_np(np.asarray(waveform))
    err = float(np.max(np.abs(np.asarray(feats) - ref)))
    assert np.allclose(np.asarray(feats), ref, atol=2e-2, rtol=2e-2), err
    print("KERNEL_OK")
</pallas_src>

<mosaic_0001>
module attributes {stable_mosaic.version = 11 : i64} {
  func.func @kernel(%arg0: i32, %arg1: memref<8x512xf32, #tpu.memory_space<vmem>>, %arg2: memref<512x768xf32, #tpu.memory_space<vmem>>, %arg3: memref<768x128xf32, #tpu.memory_space<vmem>>, %arg4: memref<8x128xf32, #tpu.memory_space<vmem>>, %arg5: memref<8x128xf32, #tpu.memory_space<vmem>>) attributes {dimension_semantics = [#tpu.dimension_semantics<parallel>], iteration_bounds = array<i64: 1>, scalar_prefetch = 0 : i64, scratch_operands = 0 : i64, tpu.core_type = #tpu.core_type<tc>, window_params = [{transform_indices = @transform_0, window_bounds = array<i64: 8, 512>}, {pipeline_mode = #tpu.pipeline_mode<synchronous>, transform_indices = @transform_1, window_bounds = array<i64: 512, 768>}, {pipeline_mode = #tpu.pipeline_mode<synchronous>, transform_indices = @transform_2, window_bounds = array<i64: 768, 128>}, {transform_indices = @transform_3, window_bounds = array<i64: 8, 128>}, {transform_indices = @transform_4, window_bounds = array<i64: 8, 128>}]} {
    %c0 = arith.constant 0 : index
    %c0_0 = arith.constant 0 : index
    %0 = vector.load %arg1[%c0, %c0_0] : memref<8x512xf32, #tpu.memory_space<vmem>>, vector<8x512xf32>
    %cst = arith.constant dense<0.000000e+00> : vector<8xf32>
    %1 = vector.multi_reduction <add>, %0, %cst [1] : vector<8x512xf32> to vector<8xf32>
    %2 = vector.shape_cast %1 : vector<8xf32> to vector<8x1xf32>
    %cst_1 = arith.constant 2.500000e-03 : f32
    %3 = vector.broadcast %cst_1 : f32 to vector<8x1xf32>
    %4 = arith.mulf %2, %3 : vector<8x1xf32>
    %5 = vector.broadcast %4 : vector<8x1xf32> to vector<8x512xf32>
    %6 = arith.subf %0, %5 : vector<8x512xf32>
    %c0_2 = arith.constant 0 : index
    %c0_3 = arith.constant 0 : index
    %7 = vector.load %arg2[%c0_2, %c0_3] : memref<512x768xf32, #tpu.memory_space<vmem>>, vector<512x768xf32>
    %cst_4 = arith.constant dense<0.000000e+00> : vector<8x768xf32>
    %8 = tpu.matmul %6, %7, %cst_4 {dimension_numbers = #tpu.dot_dimension_numbers<[1], [0], [0], [1], [0, 0, 1, 1], [], []>} : vector<8x512xf32>, vector<512x768xf32>, vector<8x768xf32> -> vector<8x768xf32>
    %9 = arith.mulf %8, %8 : vector<8x768xf32>
    %c0_5 = arith.constant 0 : index
    %c0_6 = arith.constant 0 : index
    %10 = vector.load %arg3[%c0_5, %c0_6] : memref<768x128xf32, #tpu.memory_space<vmem>>, vector<768x128xf32>
    %cst_7 = arith.constant dense<0.000000e+00> : vector<8x128xf32>
    %11 = tpu.matmul %9, %10, %cst_7 {dimension_numbers = #tpu.dot_dimension_numbers<[1], [0], [0], [1], [0, 0, 1, 1], [], []>} : vector<8x768xf32>, vector<768x128xf32>, vector<8x128xf32> -> vector<8x128xf32>
    %cst_8 = arith.constant 1.1920929E-7 : f32
    %12 = vector.broadcast %cst_8 : f32 to vector<8x128xf32>
    %13 = arith.maximumf %11, %12 : vector<8x128xf32>
    %14 = math.log %13 : vector<8x128xf32>
    %c0_9 = arith.constant 0 : index
    %c0_10 = arith.constant 0 : index
    %15 = vector.load %arg4[%c0_9, %c0_10] : memref<8x128xf32, #tpu.memory_space<vmem>>, vector<8x128xf32>
    tpu.vector_store %arg4[%c0_9, %c0_10], %14 {strides = array<i32>} : memref<8x128xf32, #tpu.memory_space<vmem>>, vector<8x128xf32>,
    %c8_i32 = arith.constant 8 : i32
    %16 = arith.muli %arg0, %c8_i32 : i32
    %17 = tpu.iota {dimensions = array<i32: 0>} : vector<8x1xi32>
    %18 = vector.broadcast %16 : i32 to vector<8x1xi32>
    %19 = arith.addi %18, %17 : vector<8x1xi32>
    %c8_i32_11 = arith.constant 8 : i32
    %20 = vector.broadcast %c8_i32_11 : i32 to vector<8x1xi32>
    %21 = arith.cmpi slt, %19, %20 : vector<8x1xi32>
    %cst_12 = arith.constant 0.000000e+00 : f32
    %22 = vector.shape_cast %21 : vector<8x1xi1> to vector<8x1xi1>
    %23 = vector.broadcast %22 : vector<8x1xi1> to vector<8x128xi1>
    %24 = vector.broadcast %cst_12 : f32 to vector<8x128xf32>
    %25 = arith.select %23, %14, %24 : vector<8x128xi1>, vector<8x128xf32>
    %cst_13 = arith.constant dense<0.000000e+00> : vector<128xf32>
    %26 = vector.multi_reduction <add>, %25, %cst_13 [0] : vector<8x128xf32> to vector<128xf32>
    %27 = vector.shape_cast %26 : vector<128xf32> to vector<1x128xf32>
    %28 = arith.mulf %25, %25 : vector<8x128xf32>
    %cst_14 = arith.constant dense<0.000000e+00> : vector<128xf32>
    %29 = vector.multi_reduction <add>, %28, %cst_14 [0] : vector<8x128xf32> to vector<128xf32>
    %30 = vector.shape_cast %29 : vector<128xf32> to vector<1x128xf32>
    %cst_15 = arith.constant 0.000000e+00 : f32
    %31 = vector.broadcast %cst_15 : f32 to vector<6x128xf32>
    %32 = tpu.concatenate %27, %30, %31 in 0 : vector<1x128xf32>, vector<1x128xf32>, vector<6x128xf32> -> vector<8x128xf32>
    %c0_16 = arith.constant 0 : index
    %c0_17 = arith.constant 0 : index
    %33 = vector.load %arg5[%c0_16, %c0_17] : memref<8x128xf32, #tpu.memory_space<vmem>>, vector<8x128xf32>
    tpu.vector_store %arg5[%c0_16, %c0_17], %32 {strides = array<i32>} : memref<8x128xf32, #tpu.memory_space<vmem>>, vector<8x128xf32>,
    return
  }
  func.func @transform_0(%arg0: i32) -> (i32, i32) {
    %c0_i32 = arith.constant 0 : i32
    %c0_i32_0 = arith.constant 0 : i32
    return %arg0, %c0_i32 : i32, i32
  }
  func.func @transform_1(%arg0: i32) -> (i32, i32) {
    %c0_i32 = arith.constant 0 : i32
    %c0_i32_0 = arith.constant 0 : i32
    %c0_i32_1 = arith.constant 0 : i32
    return %c0_i32, %c0_i32_0 : i32, i32
  }
  func.func @transform_2(%arg0: i32) -> (i32, i32) {
    %c0_i32 = arith.constant 0 : i32
    %c0_i32_0 = arith.constant 0 : i32
    %c0_i32_1 = arith.constant 0 : i32
    return %c0_i32, %c0_i32_0 : i32, i32
  }
  func.func @transform_3(%arg0: i32) -> (i32, i32) {
    %c0_i32 = arith.constant 0 : i32
    %c0_i32_0 = arith.constant 0 : i32
    return %arg0, %c0_i32 : i32, i32
  }
  func.func @transform_4(%arg0: i32) -> (i32, i32) {
    %c0_i32 = arith.constant 0 : i32
    %c0_i32_0 = arith.constant 0 : i32
    return %arg0, %c0_i32 : i32, i32
  }
}

</mosaic_0001>

<llo_original>
// kernel: tpu_custom_call.1
$region0: #{tpu_custom_call.1}
  #allocation0 [shape = 'u32[]', space=smem, size = 0x4, offset = 0x4, fixed_abs, tag = 'smem constant byte address 0x4 - core index']
  #allocation1 [shape = 'u32[144,128]{1,0:T(1,128)}', space=vmem, size = 0x12000, scoped, tag = 'internal scratch']
  %s0 = inlined_call_operand.hbm [shape: f32[8,512], index: 0, kind: input, shape index: {}]
  %s1 = inlined_call_operand.hbm [shape: f32[512,768], index: 1, kind: input, shape index: {}]
  %s2 = inlined_call_operand.hbm [shape: f32[768,128], index: 2, kind: input, shape index: {}]
  %s3 = inlined_call_operand.hbm [shape: f32[8,128], index: 3, kind: output, shape index: {0}]
  %s4 = inlined_call_operand.hbm [shape: f32[8,128], index: 4, kind: output, shape index: {1}]
  %5 = xla_tuple %s3, %s4
  %s6 = sld [smem:[#allocation0]]
  $region42: #{tpu_custom_call.1} parent=0
    _
  %s8 = ssub.s32 1, %s6
  %s9 = scalar_select 0, %s8, %s6
  $region1: #{tpu_custom_call.1} parent=0
    #allocation2 [shape = 'u8[16384]{0}', space=vmem, size = 0x4000, scoped, tag = 'input window, operand 0, single buffered']
    #allocation3 [shape = 's32[1]{0}', space=sflag, size = 0x4, scoped, tag = 'scoped memory for tpu_custom_call.1']
    #allocation4 [shape = 's32[1]{0}', space=sflag, size = 0x4, scoped, tag = 'scoped memory for tpu_custom_call.1']
    #allocation5 [shape = 'u8[1572864]{0}', space=vmem, size = 0x180000, scoped, tag = 'input window, operand 1, single buffered']
    #allocation6 [shape = 's32[1]{0}', space=sflag, size = 0x4, scoped, tag = 'scoped memory for tpu_custom_call.1']
    #allocation7 [shape = 'u8[393216]{0}', space=vmem, size = 0x60000, scoped, tag = 'input window, operand 2, single buffered']
    #allocation8 [shape = 'u8[4096]{0}', space=vmem, size = 0x1000, scoped, tag = 'output window, operand 0, single buffered']
    #allocation9 [shape = 'u8[4096]{0}', space=vmem, size = 0x1000, scoped, tag = 'output window, operand 1, single buffered']
    #allocation10 [shape = 's32[1]{0}', space=sflag, size = 0x4, scoped, tag = 'scoped memory for tpu_custom_call.1']
    %10 = vsyncpa [#allocation3], 0
    %11 = vsyncpa [#allocation6], 0
    %12 = vsyncpa [#allocation4], 0
    %13 = vsyncpa [#allocation10], 0
    // Predicated region
    $region2: #{tpu_custom_call.1} parent=1 // pred_check
      _
    $region3: #{tpu_custom_call.1} parent=1 // pred_check_branch
      %15 = sbr.rel (0) target = $region5
    $region4: #{tpu_custom_call.1} parent=1 // pred_region
      %s17 = ssub.s32 512, 512
      %18 = vsyncadd [#allocation3], %s17
      %s20 = sshll.u32 [#allocation2], 4
      %s21 = int_to_ptr.vmem [resolvable:$true] %s20
      %23 = dma.hbm_to_vmem [thread:$0]  %s0, 512, %s21, [#allocation3]
    $region5: #{tpu_custom_call.1} parent=1 // pred_fallthru
      _
    // Predicated region
    $region6: #{tpu_custom_call.1} parent=1 // pred_check
      _
    $region7: #{tpu_custom_call.1} parent=1 // pred_check_branch
      %25 = sbr.rel (0) target = $region9
    $region8: #{tpu_custom_call.1} parent=1 // pred_region
      %s27 = ssub.s32 49152, 49152
      %28 = vsyncadd [#allocation6], %s27
      %s29 = sshll.u32 [#allocation5], 4
      %s30 = int_to_ptr.vmem [resolvable:$true] %s29
      %35 = dma.hbm_to_vmem [thread:$0]  %s1, 49152, %s30, [#allocation6], 768, 768, 48
    $region9: #{tpu_custom_call.1} parent=1 // pred_fallthru
      _
    // Predicated region
    $region10: #{tpu_custom_call.1} parent=1 // pred_check
      _
    $region11: #{tpu_custom_call.1} parent=1 // pred_check_branch
      %37 = sbr.rel (0) target = $region13
    $region12: #{tpu_custom_call.1} parent=1 // pred_region
      %s39 = ssub.s32 12288, 12288
      %40 = vsyncadd [#allocation6], %s39
      %s41 = sshll.u32 [#allocation7], 4
      %s42 = int_to_ptr.vmem [resolvable:$true] %s41
      %47 = dma.hbm_to_vmem [thread:$0]  %s2, 12288, %s42, [#allocation6], 128, 128, 8
    $region13: #{tpu_custom_call.1} parent=1 // pred_fallthru
      _
    // Predicated region
    $region14: #{tpu_custom_call.1} parent=1 // pred_check
      _
    $region15: #{tpu_custom_call.1} parent=1 // pred_check_branch
      %49 = sbr.rel (0) target = $region17
    $region16: #{tpu_custom_call.1} parent=1 // pred_region
      %50 = dma.done [#allocation3], 512
    $region17: #{tpu_custom_call.1} parent=1 // pred_fallthru
      _
    // Predicated region
    $region18: #{tpu_custom_call.1} parent=1 // pred_check
      _
    $region19: #{tpu_custom_call.1} parent=1 // pred_check_branch
      %52 = sbr.rel (0) target = $region21
    $region20: #{tpu_custom_call.1} parent=1 // pred_region
      %53 = dma.done [#allocation6], 49152
    $region21: #{tpu_custom_call.1} parent=1 // pred_fallthru
      _
    // Predicated region
    $region22: #{tpu_custom_call.1} parent=1 // pred_check
      _
    $region23: #{tpu_custom_call.1} parent=1 // pred_check_branch
      %55 = sbr.rel (0) target = $region25
    $region24: #{tpu_custom_call.1} parent=1 // pred_region
      %56 = dma.done [#allocation6], 12288
    $region25: #{tpu_custom_call.1} parent=1 // pred_fallthru
      _
    %v57 = vld [vmem:[#allocation2] sm:$0xff]
    %v58 = vld [vmem:[#allocation2 + $0x8] sm:$0xff]
    %v59 = vld [vmem:[#allocation2 + $0x10] sm:$0xff]
    %v60 = vld [vmem:[#allocation2 + $0x18] sm:$0xff]
    %v61 = vadd.f32 %v57, %v58
    %v62 = vadd.f32 %v61, %v59
    %v63 = vadd.f32 %v62, %v60
    %64 = vadd.xlane.f32.xlu0 %v63
    %v65 = vpop.xlane.xlu0 %64
    %v66 = vmul.f32 %v65, 0.0025
    %v67 = vsub.f32 %v57, %v66
    %v68 = vsub.f32 %v58, %v66
    %v69 = vsub.f32 %v59, %v66
    %v70 = vsub.f32 %v60, %v66
    %v71 = vld [vmem:[#allocation5] sm:$0xff]
    %v72 = vld [vmem:[#allocation5 + $0x8] sm:$0xff]
    %v73 = vld [vmem:[#allocation5 + $0x10] sm:$0xff]
    %v74 = vld [vmem:[#allocation5 + $0x18] sm:$0xff]
    %v75 = vld [vmem:[#allocation5 + $0x20] sm:$0xff]
    %v76 = vld [vmem:[#allocation5 + $0x28] sm:$0xff]
    %v77 = vld [vmem:[#allocation5 + $0x30] sm:$0xff]
    %v78 = vld [vmem:[#allocation5 + $0x38] sm:$0xff]
    %v79 = vld [vmem:[#allocation5 + $0x40] sm:$0xff]
    %v80 = vld [vmem:[#allocation5 + $0x48] sm:$0xff]
    %v81 = vld [vmem:[#allocation5 + $0x50] sm:$0xff]
    %v82 = vld [vmem:[#allocation5 + $0x58] sm:$0xff]
    %v83 = vld [vmem:[#allocation5 + $0x60] sm:$0xff]
    %v84 = vld [vmem:[#allocation5 + $0x68] sm:$0xff]
    %v85 = vld [vmem:[#allocation5 + $0x70] sm:$0xff]
    %v86 = vld [vmem:[#allocation5 + $0x78] sm:$0xff]
    %v87 = vld [vmem:[#allocation5 + $0x80] sm:$0xff]
    %v88 = vld [vmem:[#allocation5 + $0x88] sm:$0xff]
    %v89 = vld [vmem:[#allocation5 + $0x90] sm:$0xff]
    %v90 = vld [vmem:[#allocation5 + $0x98] sm:$0xff]
    %v91 = vld [vmem:[#allocation5 + $0xa0] sm:$0xff]
    %v92 = vld [vmem:[#allocation5 + $0xa8] sm:$0xff]
    %v93 = vld [vmem:[#allocation5 + $0xb0] sm:$0xff]
    %v94 = vld [vmem:[#allocation5 + $0xb8] sm:$0xff]
    %v95 = vld [vmem:[#allocation5 + $0xc0] sm:$0xff]
    %v96 = vld [vmem:[#allocation5 + $0xc8] sm:$0xff]
    %v97 = vld [vmem:[#allocation5 + $0xd0] sm:$0xff]
    %v98 = vld [vmem:[#allocation5 + $0xd8] sm:$0xff]
    %v99 = vld [vmem:[#allocation5 + $0xe0] sm:$0xff]
    %v100 = vld [vmem:[#allocation5 + $0xe8] sm:$0xff]
    %v101 = vld [vmem:[#allocation5 + $0xf0] sm:$0xff]
    %v102 = vld [vmem:[#allocation5 + $0xf8] sm:$0xff]
    %v103 = vld [vmem:[#allocation5 + $0x100] sm:$0xff]
    %v104 = vld [vmem:[#allocation5 + $0x108] sm:$0xff]
    %v105 = vld [vmem:[#allocation5 + $0x110] sm:$0xff]
    %v106 = vld [vmem:[#allocation5 + $0x118] sm:$0xff]
    %v107 = vld [vmem:[#allocation5 + $0x120] sm:$0xff]
    %v108 = vld [vmem:[#allocation5 + $0x128] sm:$0xff]
    %v109 = vld [vmem:[#allocation5 + $0x130] sm:$0xff]
    %v110 = vld [vmem:[#allocation5 + $0x138] sm:$0xff]
    %v111 = vld [vmem:[#allocation5 + $0x140] sm:$0xff]
    %v112 = vld [vmem:[#allocation5 + $0x148] sm:$0xff]
    %v113 = vld [vmem:[#allocation5 + $0x150] sm:$0xff]
    %v114 = vld [vmem:[#allocation5 + $0x158] sm:$0xff]
    %v115 = vld [vmem:[#allocation5 + $0x160] sm:$0xff]
    %v116 = vld [vmem:[#allocation5 + $0x168] sm:$0xff]
    %v117 = vld [vmem:[#allocation5 + $0x170] sm:$0xff]
    %v118 = vld [vmem:[#allocation5 + $0x178] sm:$0xff]
    %v119 = vld [vmem:[#allocation5 + $0x180] sm:$0xff]
    %v120 = vld [vmem:[#allocation5 + $0x188] sm:$0xff]
    %v121 = vld [vmem:[#allocation5 + $0x190] sm:$0xff]
    %v122 = vld [vmem:[#allocation5 + $0x198] sm:$0xff]
    %v123 = vld [vmem:[#allocation5 + $0x1a0] sm:$0xff]
    %v124 = vld [vmem:[#allocation5 + $0x1a8] sm:$0xff]
    %v125 = vld [vmem:[#allocation5 + $0x1b0] sm:$0xff]
    %v126 = vld [vmem:[#allocation5 + $0x1b8] sm:$0xff]
    %v127 = vld [vmem:[#allocation5 + $0x1c0] sm:$0xff]
    %v128 = vld [vmem:[#allocation5 + $0x1c8] sm:$0xff]
    %v129 = vld [vmem:[#allocation5 + $0x1d0] sm:$0xff]
    %v130 = vld [vmem:[#allocation5 + $0x1d8] sm:$0xff]
    %v131 = vld [vmem:[#allocation5 + $0x1e0] sm:$0xff]
    %v132 = vld [vmem:[#allocation5 + $0x1e8] sm:$0xff]
    %v133 = vld [vmem:[#allocation5 + $0x1f0] sm:$0xff]
    %v134 = vld [vmem:[#allocation5 + $0x1f8] sm:$0xff]
    %v135 = vld [vmem:[#allocation5 + $0x200] sm:$0xff]
    %v136 = vld [vmem:[#allocation5 + $0x208] sm:$0xff]
    %v137 = vld [vmem:[#allocation5 + $0x210] sm:$0xff]
    %v138 = vld [vmem:[#allocation5 + $0x218] sm:$0xff]
    %v139 = vld [vmem:[#allocation5 + $0x220] sm:$0xff]
    %v140 = vld [vmem:[#allocation5 + $0x228] sm:$0xff]
    %v141 = vld [vmem:[#allocation5 + $0x230] sm:$0xff]
    %v142 = vld [vmem:[#allocation5 + $0x238] sm:$0xff]
    %v143 = vld [vmem:[#allocation5 + $0x240] sm:$0xff]
    %v144 = vld [vmem:[#allocation5 + $0x248] sm:$0xff]
    %v145 = vld [vmem:[#allocation5 + $0x250] sm:$0xff]
    %v146 = vld [vmem:[#allocation5 + $0x258] sm:$0xff]
    %v147 = vld [vmem:[#allocation5 + $0x260] sm:$0xff]
    %v148 = vld [vmem:[#allocation5 + $0x268] sm:$0xff]
    %v149 = vld [vmem:[#allocation5 + $0x270] sm:$0xff]
    %v150 = vld [vmem:[#allocation5 + $0x278] sm:$0xff]
    %v151 = vld [vmem:[#allocation5 + $0x280] sm:$0xff]
    %v152 = vld [vmem:[#allocation5 + $0x288] sm:$0xff]
    %v153 = vld [vmem:[#allocation5 + $0x290] sm:$0xff]
    %v154 = vld [vmem:[#allocation5 + $0x298] sm:$0xff]
    %v155 = vld [vmem:[#allocation5 + $0x2a0] sm:$0xff]
    %v156 = vld [vmem:[#allocation5 + $0x2a8] sm:$0xff]
    %v157 = vld [vmem:[#allocation5 + $0x2b0] sm:$0xff]
    %v158 = vld [vmem:[#allocation5 + $0x2b8] sm:$0xff]
    %v159 = vld [vmem:[#allocation5 + $0x2c0] sm:$0xff]
    %v160 = vld [vmem:[#allocation5 + $0x2c8] sm:$0xff]
    %v161 = vld [vmem:[#allocation5 + $0x2d0] sm:$0xff]
    %v162 = vld [vmem:[#allocation5 + $0x2d8] sm:$0xff]
    %v163 = vld [vmem:[#allocation5 + $0x2e0] sm:$0xff]
    %v164 = vld [vmem:[#allocation5 + $0x2e8] sm:$0xff]
    %v165 = vld [vmem:[#allocation5 + $0x2f0] sm:$0xff]
    %v166 = vld [vmem:[#allocation5 + $0x2f8] sm:$0xff]
    %v167 = vld [vmem:[#allocation5 + $0x300] sm:$0xff]
    %v168 = vld [vmem:[#allocation5 + $0x308] sm:$0xff]
    %v169 = vld [vmem:[#allocation5 + $0x310] sm:$0xff]
    %v170 = vld [vmem:[#allocation5 + $0x318] sm:$0xff]
    %v171 = vld [vmem:[#allocation5 + $0x320] sm:$0xff]
    %v172 = vld [vmem:[#allocation5 + $0x328] sm:$0xff]
    %v173 = vld [vmem:[#allocation5 + $0x330] sm:$0xff]
    %v174 = vld [vmem:[#allocation5 + $0x338] sm:$0xff]
    %v175 = vld [vmem:[#allocation5 + $0x340] sm:$0xff]
    %v176 = vld [vmem:[#allocation5 + $0x348] sm:$0xff]
    %v177 = vld [vmem:[#allocation5 + $0x350] sm:$0xff]
    %v178 = vld [vmem:[#allocation5 + $0x358] sm:$0xff]
    %v179 = vld [vmem:[#allocation5 + $0x360] sm:$0xff]
    %v180 = vld [vmem:[#allocation5 + $0x368] sm:$0xff]
    %v181 = vld [vmem:[#allocation5 + $0x370] sm:$0xff]
    %v182 = vld [vmem:[#allocation5 + $0x378] sm:$0xff]
    %v183 = vld [vmem:[#allocation5 + $0x380] sm:$0xff]
    %v184 = vld [vmem:[#allocation5 + $0x388] sm:$0xff]
    %v185 = vld [vmem:[#allocation5 + $0x390] sm:$0xff]
    %v186 = vld [vmem:[#allocation5 + $0x398] sm:$0xff]
    %v187 = vld [vmem:[#allocation5 + $0x3a0] sm:$0xff]
    %v188 = vld [vmem:[#allocation5 + $0x3a8] sm:$0xff]
    %v189 = vld [vmem:[#allocation5 + $0x3b0] sm:$0xff]
    %v190 = vld [vmem:[#allocation5 + $0x3b8] sm:$0xff]
    %v191 = vld [vmem:[#allocation5 + $0x3c0] sm:$0xff]
    %v192 = vld [vmem:[#allocation5 + $0x3c8] sm:$0xff]
    %v193 = vld [vmem:[#allocation5 + $0x3d0] sm:$0xff]
    %v194 = vld [vmem:[#allocation5 + $0x3d8] sm:$0xff]
    %v195 = vld [vmem:[#allocation5 + $0x3e0] sm:$0xff]
    %v196 = vld [vmem:[#allocation5 + $0x3e8] sm:$0xff]
    %v197 = vld [vmem:[#allocation5 + $0x3f0] sm:$0xff]
    %v198 = vld [vmem:[#allocation5 + $0x3f8] sm:$0xff]
    %v199 = vld [vmem:[#allocation5 + $0x400] sm:$0xff]
    %v200 = vld [vmem:[#allocation5 + $0x408] sm:$0xff]
    %v201 = vld [vmem:[#allocation5 + $0x410] sm:$0xff]
    %v202 = vld [vmem:[#allocation5 + $0x418] sm:$0xff]
    %v203 = vld [vmem:[#allocation5 + $0x420] sm:$0xff]
    %v204 = vld [vmem:[#allocation5 + $0x428] sm:$0xff]
    %v205 = vld [vmem:[#allocation5 + $0x430] sm:$0xff]
    %v206 = vld [vmem:[#allocation5 + $0x438] sm:$0xff]
    %v207 = vld [vmem:[#allocation5 + $0x440] sm:$0xff]
    %v208 = vld [vmem:[#allocation5 + $0x448] sm:$0xff]
    %v209 = vld [vmem:[#allocation5 + $0x450] sm:$0xff]
    %v210 = vld [vmem:[#allocation5 + $0x458] sm:$0xff]
    %v211 = vld [vmem:[#allocation5 + $0x460] sm:$0xff]
    %v212 = vld [vmem:[#allocation5 + $0x468] sm:$0xff]
    %v213 = vld [vmem:[#allocation5 + $0x470] sm:$0xff]
    %v214 = vld [vmem:[#allocation5 + $0x478] sm:$0xff]
    %v215 = vld [vmem:[#allocation5 + $0x480] sm:$0xff]
    %v216 = vld [vmem:[#allocation5 + $0x488] sm:$0xff]
    %v217 = vld [vmem:[#allocation5 + $0x490] sm:$0xff]
    %v218 = vld [vmem:[#allocation5 + $0x498] sm:$0xff]
    %v219 = vld [vmem:[#allocation5 + $0x4a0] sm:$0xff]
    %v220 = vld [vmem:[#allocation5 + $0x4a8] sm:$0xff]
    %v221 = vld [vmem:[#allocation5 + $0x4b0] sm:$0xff]
    %v222 = vld [vmem:[#allocation5 + $0x4b8] sm:$0xff]
    %v223 = vld [vmem:[#allocation5 + $0x4c0] sm:$0xff]
    %v224 = vld [vmem:[#allocation5 + $0x4c8] sm:$0xff]
    %v225 = vld [vmem:[#allocation5 + $0x4d0] sm:$0xff]
    %v226 = vld [vmem:[#allocation5 + $0x4d8] sm:$0xff]
    %v227 = vld [vmem:[#allocation5 + $0x4e0] sm:$0xff]
    %v228 = vld [vmem:[#allocation5 + $0x4e8] sm:$0xff]
    %v229 = vld [vmem:[#allocation5 + $0x4f0] sm:$0xff]
    %v230 = vld [vmem:[#allocation5 + $0x4f8] sm:$0xff]
    %v231 = vld [vmem:[#allocation5 + $0x500] sm:$0xff]
    %v232 = vld [vmem:[#allocation5 + $0x508] sm:$0xff]
    %v233 = vld [vmem:[#allocation5 + $0x510] sm:$0xff]
    %v234 = vld [vmem:[#allocation5 + $0x518] sm:$0xff]
    %v235 = vld [vmem:[#allocation5 + $0x520] sm:$0xff]
    %v236 = vld [vmem:[#allocation5 + $0x528] sm:$0xff]
    %v237 = vld [vmem:[#allocation5 + $0x530] sm:$0xff]
    %v238 = vld [vmem:[#allocation5 + $0x538] sm:$0xff]
    %v239 = vld [vmem:[#allocation5 + $0x540] sm:$0xff]
    %v240 = vld [vmem:[#allocation5 + $0x548] sm:$0xff]
    %v241 = vld [vmem:[#allocation5 + $0x550] sm:$0xff]
    %v242 = vld [vmem:[#allocation5 + $0x558] sm:$0xff]
    %v243 = vld [vmem:[#allocation5 + $0x560] sm:$0xff]
    %v244 = vld [vmem:[#allocation5 + $0x568] sm:$0xff]
    %v245 = vld [vmem:[#allocation5 + $0x570] sm:$0xff]
    %v246 = vld [vmem:[#allocation5 + $0x578] sm:$0xff]
    %v247 = vld [vmem:[#allocation5 + $0x580] sm:$0xff]
    %v248 = vld [vmem:[#allocation5 + $0x588] sm:$0xff]
    %v249 = vld [vmem:[#allocation5 + $0x590] sm:$0xff]
    %v250 = vld [vmem:[#allocation5 + $0x598] sm:$0xff]
    %v251 = vld [vmem:[#allocation5 + $0x5a0] sm:$0xff]
    %v252 = vld [vmem:[#allocation5 + $0x5a8] sm:$0xff]
    %v253 = vld [vmem:[#allocation5 + $0x5b0] sm:$0xff]
    %v254 = vld [vmem:[#allocation5 + $0x5b8] sm:$0xff]
    %v255 = vld [vmem:[#allocation5 + $0x5c0] sm:$0xff]
    %v256 = vld [vmem:[#allocation5 + $0x5c8] sm:$0xff]
    %v257 = vld [vmem:[#allocation5 + $0x5d0] sm:$0xff]
    %v258 = vld [vmem:[#allocation5 + $0x5d8] sm:$0xff]
    %v259 = vld [vmem:[#allocation5 + $0x5e0] sm:$0xff]
    %v260 = vld [vmem:[#allocation5 + $0x5e8] sm:$0xff]
    %v261 = vld [vmem:[#allocation5 + $0x5f0] sm:$0xff]
    %v262 = vld [vmem:[#allocation5 + $0x5f8] sm:$0xff]
    %v263 = vld [vmem:[#allocation5 + $0x600] sm:$0xff]
    %v264 = vld [vmem:[#allocation5 + $0x608] sm:$0xff]
    %v265 = vld [vmem:[#allocation5 + $0x610] sm:$0xff]
    %v266 = vld [vmem:[#allocation5 + $0x618] sm:$0xff]
    %v267 = vld [vmem:[#allocation5 + $0x620] sm:$0xff]
    %v268 = vld [vmem:[#allocation5 + $0x628] sm:$0xff]
    %v269 = vld [vmem:[#allocation5 + $0x630] sm:$0xff]
    %v270 = vld [vmem:[#allocation5 + $0x638] sm:$0xff]
    %v271 = vld [vmem:[#allocation5 + $0x640] sm:$0xff]
    %v272 = vld [vmem:[#allocation5 + $0x648] sm:$0xff]
    %v273 = vld [vmem:[#allocation5 + $0x650] sm:$0xff]
    %v274 = vld [vmem:[#allocation5 + $0x658] sm:$0xff]
    %v275 = vld [vmem:[#allocation5 + $0x660] sm:$0xff]
    %v276 = vld [vmem:[#allocation5 + $0x668] sm:$0xff]
    %v277 = vld [vmem:[#allocation5 + $0x670] sm:$0xff]
    %v278 = vld [vmem:[#allocation5 + $0x678] sm:$0xff]
    %v279 = vld [vmem:[#allocation5 + $0x680] sm:$0xff]
    %v280 = vld [vmem:[#allocation5 + $0x688] sm:$0xff]
    %v281 = vld [vmem:[#allocation5 + $0x690] sm:$0xff]
    %v282 = vld [vmem:[#allocation5 + $0x698] sm:$0xff]
    %v283 = vld [vmem:[#allocation5 + $0x6a0] sm:$0xff]
    %v284 = vld [vmem:[#allocation5 + $0x6a8] sm:$0xff]
    %v285 = vld [vmem:[#allocation5 + $0x6b0] sm:$0xff]
    %v286 = vld [vmem:[#allocation5 + $0x6b8] sm:$0xff]
    %v287 = vld [vmem:[#allocation5 + $0x6c0] sm:$0xff]
    %v288 = vld [vmem:[#allocation5 + $0x6c8] sm:$0xff]
    %v289 = vld [vmem:[#allocation5 + $0x6d0] sm:$0xff]
    %v290 = vld [vmem:[#allocation5 + $0x6d8] sm:$0xff]
    %v291 = vld [vmem:[#allocation5 + $0x6e0] sm:$0xff]
    %v292 = vld [vmem:[#allocation5 + $0x6e8] sm:$0xff]
    %v293 = vld [vmem:[#allocation5 + $0x6f0] sm:$0xff]
    %v294 = vld [vmem:[#allocation5 + $0x6f8] sm:$0xff]
    %v295 = vld [vmem:[#allocation5 + $0x700] sm:$0xff]
    %v296 = vld [vmem:[#allocation5 + $0x708] sm:$0xff]
    %v297 = vld [vmem:[#allocation5 + $0x710] sm:$0xff]
    %v298 = vld [vmem:[#allocation5 + $0x718] sm:$0xff]
    %v299 = vld [vmem:[#allocation5 + $0x720] sm:$0xff]
    %v300 = vld [vmem:[#allocation5 + $0x728] sm:$0xff]
    %v301 = vld [vmem:[#allocation5 + $0x730] sm:$0xff]
    %v302 = vld [vmem:[#allocation5 + $0x738] sm:$0xff]
    %v303 = vld [vmem:[#allocation5 + $0x740] sm:$0xff]
    %v304 = vld [vmem:[#allocation5 + $0x748] sm:$0xff]
    %v305 = vld [vmem:[#allocation5 + $0x750] sm:$0xff]
    %v306 = vld [vmem:[#allocation5 + $0x758] sm:$0xff]
    %v307 = vld [vmem:[#allocation5 + $0x760] sm:$0xff]
    %v308 = vld [vmem:[#allocation5 + $0x768] sm:$0xff]
    %v309 = vld [vmem:[#allocation5 + $0x770] sm:$0xff]
    %v310 = vld [vmem:[#allocation5 + $0x778] sm:$0xff]
    %v311 = vld [vmem:[#allocation5 + $0x780] sm:$0xff]
    %v312 = vld [vmem:[#allocation5 + $0x788] sm:$0xff]
    %v313 = vld [vmem:[#allocation5 + $0x790] sm:$0xff]
    %v314 = vld [vmem:[#allocation5 + $0x798] sm:$0xff]
    %v315 = vld [vmem:[#allocation5 + $0x7a0] sm:$0xff]
    %v316 = vld [vmem:[#allocation5 + $0x7a8] sm:$0xff]
    %v317 = vld [vmem:[#allocation5 + $0x7b0] sm:$0xff]
    %v318 = vld [vmem:[#allocation5 + $0x7b8] sm:$0xff]
    %v319 = vld [vmem:[#allocation5 + $0x7c0] sm:$0xff]
    %v320 = vld [vmem:[#allocation5 + $0x7c8] sm:$0xff]
    %v321 = vld [vmem:[#allocation5 + $0x7d0] sm:$0xff]
    %v322 = vld [vmem:[#allocation5 + $0x7d8] sm:$0xff]
    %v323 = vld [vmem:[#allocation5 + $0x7e0] sm:$0xff]
    %v324 = vld [vmem:[#allocation5 + $0x7e8] sm:$0xff]
    %v325 = vld [vmem:[#allocation5 + $0x7f0] sm:$0xff]
    %v326 = vld [vmem:[#allocation5 + $0x7f8] sm:$0xff]
    %v327 = vld [vmem:[#allocation5 + $0x800] sm:$0xff]
    %v328 = vld [vmem:[#allocation5 + $0x808] sm:$0xff]
    %v329 = vld [vmem:[#allocation5 + $0x810] sm:$0xff]
    %v330 = vld [vmem:[#allocation5 + $0x818] sm:$0xff]
    %v331 = vld [vmem:[#allocation5 + $0x820] sm:$0xff]
    %v332 = vld [vmem:[#allocation5 + $0x828] sm:$0xff]
    %v333 = vld [vmem:[#allocation5 + $0x830] sm:$0xff]
    %v334 = vld [vmem:[#allocation5 + $0x838] sm:$0xff]
    %v335 = vld [vmem:[#allocation5 + $0x840] sm:$0xff]
    %v336 = vld [vmem:[#allocation5 + $0x848] sm:$0xff]
    %v337 = vld [vmem:[#allocation5 + $0x850] sm:$0xff]
    %v338 = vld [vmem:[#allocation5 + $0x858] sm:$0xff]
    %v339 = vld [vmem:[#allocation5 + $0x860] sm:$0xff]
    %v340 = vld [vmem:[#allocation5 + $0x868] sm:$0xff]
    %v341 = vld [vmem:[#allocation5 + $0x870] sm:$0xff]
    %v342 = vld [vmem:[#allocation5 + $0x878] sm:$0xff]
    %v343 = vld [vmem:[#allocation5 + $0x880] sm:$0xff]
    %v344 = vld [vmem:[#allocation5 + $0x888] sm:$0xff]
    %v345 = vld [vmem:[#allocation5 + $0x890] sm:$0xff]
    %v346 = vld [vmem:[#allocation5 + $0x898] sm:$0xff]
    %v347 = vld [vmem:[#allocation5 + $0x8a0] sm:$0xff]
    %v348 = vld [vmem:[#allocation5 + $0x8a8] sm:$0xff]
    %v349 = vld [vmem:[#allocation5 + $0x8b0] sm:$0xff]
    %v350 = vld [vmem:[#allocation5 + $0x8b8] sm:$0xff]
    %v351 = vld [vmem:[#allocation5 + $0x8c0] sm:$0xff]
    %v352 = vld [vmem:[#allocation5 + $0x8c8] sm:$0xff]
    %v353 = vld [vmem:[#allocation5 + $0x8d0] sm:$0xff]
    %v354 = vld [vmem:[#allocation5 + $0x8d8] sm:$0xff]
    %v355 = vld [vmem:[#allocation5 + $0x8e0] sm:$0xff]
    %v356 = vld [vmem:[#allocation5 + $0x8e8] sm:$0xff]
    %v357 = vld [vmem:[#allocation5 + $0x8f0] sm:$0xff]
    %v358 = vld [vmem:[#allocation5 + $0x8f8] sm:$0xff]
    %v359 = vld [vmem:[#allocation5 + $0x900] sm:$0xff]
    %v360 = vld [vmem:[#allocation5 + $0x908] sm:$0xff]
    %v361 = vld [vmem:[#allocation5 + $0x910] sm:$0xff]
    %v362 = vld [vmem:[#allocation5 + $0x918] sm:$0xff]
    %v363 = vld [vmem:[#allocation5 + $0x920] sm:$0xff]
    %v364 = vld [vmem:[#allocation5 + $0x928] sm:$0xff]
    %v365 = vld [vmem:[#allocation5 + $0x930] sm:$0xff]
    %v366 = vld [vmem:[#allocation5 + $0x938] sm:$0xff]
    %v367 = vld [vmem:[#allocation5 + $0x940] sm:$0xff]
    %v368 = vld [vmem:[#allocation5 + $0x948] sm:$0xff]
    %v369 = vld [vmem:[#allocation5 + $0x950] sm:$0xff]
    %v370 = vld [vmem:[#allocation5 + $0x958] sm:$0xff]
    %v371 = vld [vmem:[#allocation5 + $0x960] sm:$0xff]
    %v372 = vld [vmem:[#allocation5 + $0x968] sm:$0xff]
    %v373 = vld [vmem:[#allocation5 + $0x970] sm:$0xff]
    %v374 = vld [vmem:[#allocation5 + $0x978] sm:$0xff]
    %v375 = vld [vmem:[#allocation5 + $0x980] sm:$0xff]
    %v376 = vld [vmem:[#allocation5 + $0x988] sm:$0xff]
    %v377 = vld [vmem:[#allocation5 + $0x990] sm:$0xff]
    %v378 = vld [vmem:[#allocation5 + $0x998] sm:$0xff]
    %v379 = vld [vmem:[#allocation5 + $0x9a0] sm:$0xff]
    %v380 = vld [vmem:[#allocation5 + $0x9a8] sm:$0xff]
    %v381 = vld [vmem:[#allocation5 + $0x9b0] sm:$0xff]
    %v382 = vld [vmem:[#allocation5 + $0x9b8] sm:$0xff]
    %v383 = vld [vmem:[#allocation5 + $0x9c0] sm:$0xff]
    %v384 = vld [vmem:[#allocation5 + $0x9c8] sm:$0xff]
    %v385 = vld [vmem:[#allocation5 + $0x9d0] sm:$0xff]
    %v386 = vld [vmem:[#allocation5 + $0x9d8] sm:$0xff]
    %v387 = vld [vmem:[#allocation5 + $0x9e0] sm:$0xff]
    %v388 = vld [vmem:[#allocation5 + $0x9e8] sm:$0xff]
    %v389 = vld [vmem:[#allocation5 + $0x9f0] sm:$0xff]
    %v390 = vld [vmem:[#allocation5 + $0x9f8] sm:$0xff]
    %v391 = vld [vmem:[#allocation5 + $0xa00] sm:$0xff]
    %v392 = vld [vmem:[#allocation5 + $0xa08] sm:$0xff]
    %v393 = vld [vmem:[#allocation5 + $0xa10] sm:$0xff]
    %v394 = vld [vmem:[#allocation5 + $0xa18] sm:$0xff]
    %v395 = vld [vmem:[#allocation5 + $0xa20] sm:$0xff]
    %v396 = vld [vmem:[#allocation5 + $0xa28] sm:$0xff]
    %v397 = vld [vmem:[#allocation5 + $0xa30] sm:$0xff]
    %v398 = vld [vmem:[#allocation5 + $0xa38] sm:$0xff]
    %v399 = vld [vmem:[#allocation5 + $0xa40] sm:$0xff]
    %v400 = vld [vmem:[#allocation5 + $0xa48] sm:$0xff]
    %v401 = vld [vmem:[#allocation5 + $0xa50] sm:$0xff]
    %v402 = vld [vmem:[#allocation5 + $0xa58] sm:$0xff]
    %v403 = vld [vmem:[#allocation5 + $0xa60] sm:$0xff]
    %v404 = vld [vmem:[#allocation5 + $0xa68] sm:$0xff]
    %v405 = vld [vmem:[#allocation5 + $0xa70] sm:$0xff]
    %v406 = vld [vmem:[#allocation5 + $0xa78] sm:$0xff]
    %v407 = vld [vmem:[#allocation5 + $0xa80] sm:$0xff]
    %v408 = vld [vmem:[#allocation5 + $0xa88] sm:$0xff]
    %v409 = vld [vmem:[#allocation5 + $0xa90] sm:$0xff]
    %v410 = vld [vmem:[#allocation5 + $0xa98] sm:$0xff]
    %v411 = vld [vmem:[#allocation5 + $0xaa0] sm:$0xff]
    %v412 = vld [vmem:[#allocation5 + $0xaa8] sm:$0xff]
    %v413 = vld [vmem:[#allocation5 + $0xab0] sm:$0xff]
    %v414 = vld [vmem:[#allocation5 + $0xab8] sm:$0xff]
    %v415 = vld [vmem:[#allocation5 + $0xac0] sm:$0xff]
    %v416 = vld [vmem:[#allocation5 + $0xac8] sm:$0xff]
    %v417 = vld [vmem:[#allocation5 + $0xad0] sm:$0xff]
    %v418 = vld [vmem:[#allocation5 + $0xad8] sm:$0xff]
    %v419 = vld [vmem:[#allocation5 + $0xae0] sm:$0xff]
    %v420 = vld [vmem:[#allocation5 + $0xae8] sm:$0xff]
    %v421 = vld [vmem:[#allocation5 + $0xaf0] sm:$0xff]
    %v422 = vld [vmem:[#allocation5 + $0xaf8] sm:$0xff]
    %v423 = vld [vmem:[#allocation5 + $0xb00] sm:$0xff]
    %v424 = vld [vmem:[#allocation5 + $0xb08] sm:$0xff]
    %v425 = vld [vmem:[#allocation5 + $0xb10] sm:$0xff]
    %v426 = vld [vmem:[#allocation5 + $0xb18] sm:$0xff]
    %v427 = vld [vmem:[#allocation5 + $0xb20] sm:$0xff]
    %v428 = vld [vmem:[#allocation5 + $0xb28] sm:$0xff]
    %v429 = vld [vmem:[#allocation5 + $0xb30] sm:$0xff]
    %v430 = vld [vmem:[#allocation5 + $0xb38] sm:$0xff]
    %v431 = vld [vmem:[#allocation5 + $0xb40] sm:$0xff]
    %v432 = vld [vmem:[#allocation5 + $0xb48] sm:$0xff]
    %v433 = vld [vmem:[#allocation5 + $0xb50] sm:$0xff]
    %v434 = vld [vmem:[#allocation5 + $0xb58] sm:$0xff]
    %v435 = vld [vmem:[#allocation5 + $0xb60] sm:$0xff]
    %v436 = vld [vmem:[#allocation5 + $0xb68] sm:$0xff]
    %v437 = vld [vmem:[#allocation5 + $0xb70] sm:$0xff]
    %v438 = vld [vmem:[#allocation5 + $0xb78] sm:$0xff]
    %v439 = vld [vmem:[#allocation5 + $0xb80] sm:$0xff]
    %v440 = vld [vmem:[#allocation5 + $0xb88] sm:$0xff]
    %v441 = vld [vmem:[#allocation5 + $0xb90] sm:$0xff]
    %v442 = vld [vmem:[#allocation5 + $0xb98] sm:$0xff]
    %v443 = vld [vmem:[#allocation5 + $0xba0] sm:$0xff]
    %v444 = vld [vmem:[#allocation5 + $0xba8] sm:$0xff]
    %v445 = vld [vmem:[#allocation5 + $0xbb0] sm:$0xff]
    %v446 = vld [vmem:[#allocation5 + $0xbb8] sm:$0xff]
    %v447 = vld [vmem:[#allocation5 + $0xbc0] sm:$0xff]
    %v448 = vld [vmem:[#allocation5 + $0xbc8] sm:$0xff]
    %v449 = vld [vmem:[#allocation5 + $0xbd0] sm:$0xff]
    %v450 = vld [vmem:[#allocation5 + $0xbd8] sm:$0xff]
    %v451 = vld [vmem:[#allocation5 + $0xbe0] sm:$0xff]
    %v452 = vld [vmem:[#allocation5 + $0xbe8] sm:$0xff]
    %v453 = vld [vmem:[#allocation5 + $0xbf0] sm:$0xff]
    %v454 = vld [vmem:[#allocation5 + $0xbf8] sm:$0xff]
    %455 = vmatprep.subr.mxu0 %v162
    %456 = vmatpush1.msra.mxu0 %v161
    %457 = vmatprep.subr.mxu0 %v156
    %458 = vmatpush1.msra.mxu0 %v155
    %459 = vmatprep.subr.mxu0 %v150
    %460 = vmatpush1.msra.mxu0 %v149
    %461 = vmatprep.subr.mxu0 %v144
    %462 = vmatpush1.msra.mxu0 %v143
    %463 = vmatprep.subr.mxu0 %v138
    %464 = vmatpush1.msra.mxu0 %v137
    %465 = vmatprep.subr.mxu0 %v132
    %466 = vmatpush1.msra.mxu0 %v131
    %467 = vmatprep.subr.mxu0 %v126
    %468 = vmatpush1.msra.mxu0 %v125
    %469 = vmatprep.subr.mxu0 %v120
    %470 = vmatpush1.msra.mxu0 %v119
    %471 = vmatprep.subr.mxu0 %v114
    %472 = vmatpush1.msra.mxu0 %v113
    %473 = vmatprep.subr.mxu0 %v108
    %474 = vmatpush1.msra.mxu0 %v107
    %475 = vmatprep.subr.mxu0 %v102
    %476 = vmatpush1.msra.mxu0 %v101
    %477 = vmatprep.subr.mxu0 %v96
    %478 = vmatpush1.msra.mxu0 %v95
    %479 = vmatprep.subr.mxu0 %v90
    %480 = vmatpush1.msra.mxu0 %v89
    %481 = vmatprep.subr.mxu0 %v84
    %482 = vmatpush1.msra.mxu0 %v83
    %483 = vmatprep.subr.mxu0 %v78
    %484 = vmatpush1.msra.mxu0 %v77
    %485 = vmatprep.subr.mxu0 %v72
    %486 = vmatpush1.msra.mxu0 %v71
    %487 = vmatprep.subr.mxu0 %v258
    %488 = vmatpush2.msra.mxu0 %v257
    %489 = vmatprep.subr.mxu0 %v252
    %490 = vmatpush2.msra.mxu0 %v251
    %491 = vmatprep.subr.mxu0 %v246
    %492 = vmatpush2.msra.mxu0 %v245
    %493 = vmatprep.subr.mxu0 %v240
    %494 = vmatpush2.msra.mxu0 %v239
    %495 = vmatprep.subr.mxu0 %v234
    %496 = vmatpush2.msra.mxu0 %v233
    %497 = vmatprep.subr.mxu0 %v228
    %498 = vmatpush2.msra.mxu0 %v227
    %499 = vmatprep.subr.mxu0 %v222
    %500 = vmatpush2.msra.mxu0 %v221
    %501 = vmatprep.subr.mxu0 %v216
    %502 = vmatpush2.msra.mxu0 %v215
    %503 = vmatprep.subr.mxu0 %v210
    %504 = vmatpush2.msra.mxu0 %v209
    %505 = vmatprep.subr.mxu0 %v204
    %506 = vmatpush2.msra.mxu0 %v203
    %507 = vmatprep.subr.mxu0 %v198
    %508 = vmatpush2.msra.mxu0 %v197
    %509 = vmatprep.subr.mxu0 %v192
    %510 = vmatpush2.msra.mxu0 %v191
    %511 = vmatprep.subr.mxu0 %v186
    %512 = vmatpush2.msra.mxu0 %v185
    %513 = vmatprep.subr.mxu0 %v180
    %514 = vmatpush2.msra.mxu0 %v179
    %515 = vmatprep.subr.mxu0 %v174
    %516 = vmatpush2.msra.mxu0 %v173
    %517 = vmatprep.subr.mxu0 %v168
    %518 = vmatpush2.msra.mxu0 %v167
    %519 = vmatprep.mubr.f32.mxu0 %v68
    %520 = vmatmul.mubr.f32.gmra.mxu0 %v67
    %v521 = vpop.f32.mrf.mxu0
    %v522 = vadd.f32 0.0, %v521
    %v523 = vpop.f32.mrf.mxu0
    %v524 = vadd.f32 0.0, %v523
    %525 = vdwg.mxu0
    %526 = vmatprep.subr.mxu0 %v354
    %527 = vmatpush1.msra.mxu0 %v353
    %528 = vmatprep.subr.mxu0 %v348
    %529 = vmatpush1.msra.mxu0 %v347
    %530 = vmatprep.subr.mxu0 %v342
    %531 = vmatpush1.msra.mxu0 %v341
    %532 = vmatprep.subr.mxu0 %v336
    %533 = vmatpush1.msra.mxu0 %v335
    %534 = vmatprep.subr.mxu0 %v330
    %535 = vmatpush1.msra.mxu0 %v329
    %536 = vmatprep.subr.mxu0 %v324
    %537 = vmatpush1.msra.mxu0 %v323
    %538 = vmatprep.subr.mxu0 %v318
    %539 = vmatpush1.msra.mxu0 %v317
    %540 = vmatprep.subr.mxu0 %v312
    %541 = vmatpush1.msra.mxu0 %v311
    %542 = vmatprep.subr.mxu0 %v306
    %543 = vmatpush1.msra.mxu0 %v305
    %544 = vmatprep.subr.mxu0 %v300
    %545 = vmatpush1.msra.mxu0 %v299
    %546 = vmatprep.subr.mxu0 %v294
    %547 = vmatpush1.msra.mxu0 %v293
    %548 = vmatprep.subr.mxu0 %v288
    %549 = vmatpush1.msra.mxu0 %v287
    %550 = vmatprep.subr.mxu0 %v282
    %551 = vmatpush1.msra.mxu0 %v281
    %552 = vmatprep.subr.mxu0 %v276
    %553 = vmatpush1.msra.mxu0 %v275
    %554 = vmatprep.subr.mxu0 %v270
    %555 = vmatpush1.msra.mxu0 %v269
    %556 = vmatprep.subr.mxu0 %v264
    %557 = vmatpush1.msra.mxu0 %v263
    %558 = vmatprep.subr.mxu0 %v450
    %559 = vmatpush2.msra.mxu0 %v449
    %560 = vmatprep.subr.mxu0 %v444
    %561 = vmatpush2.msra.mxu0 %v443
    %562 = vmatprep.subr.mxu0 %v438
    %563 = vmatpush2.msra.mxu0 %v437
    %564 = vmatprep.subr.mxu0 %v432
    %565 = vmatpush2.msra.mxu0 %v431
    %566 = vmatprep.subr.mxu0 %v426
    %567 = vmatpush2.msra.mxu0 %v425
    %568 = vmatprep.subr.mxu0 %v420
    %569 = vmatpush2.msra.mxu0 %v419
    %570 = vmatprep.subr.mxu0 %v414
    %571 = vmatpush2.msra.mxu0 %v413
    %572 = vmatprep.subr.mxu0 %v408
    %573 = vmatpush2.msra.mxu0 %v407
    %574 = vmatprep.subr.mxu0 %v402
    %575 = vmatpush2.msra.mxu0 %v401
    %576 = vmatprep.subr.mxu0 %v396
    %577 = vmatpush2.msra.mxu0 %v395
    %578 = vmatprep.subr.mxu0 %v390
    %579 = vmatpush2.msra.mxu0 %v389
    %580 = vmatprep.subr.mxu0 %v384
    %581 = vmatpush2.msra.mxu0 %v383
    %582 = vmatprep.subr.mxu0 %v378
    %583 = vmatpush2.msra.mxu0 %v377
    %584 = vmatprep.subr.mxu0 %v372
    %585 = vmatpush2.msra.mxu0 %v371
    %586 = vmatprep.subr.mxu0 %v366
    %587 = vmatpush2.msra.mxu0 %v365
    %588 = vmatprep.subr.mxu0 %v360
    %589 = vmatpush2.msra.mxu0 %v359
    %590 = vmatprep.mubr.f32.mxu0 %v70
    %591 = vmatmul.mubr.f32.gmra.mxu0 %v69
    %v592 = vpop.f32.mrf.mxu0
    %v593 = vadd.f32 %v522, %v592
    %v594 = vpop.f32.mrf.mxu0
    %v595 = vadd.f32 %v524, %v594
    %596 = vdwg.mxu0
    %597 = vmatprep.subr.mxu0 %v164
    %598 = vmatpush1.msra.mxu0 %v163
    %599 = vmatprep.subr.mxu0 %v158
    %600 = vmatpush1.msra.mxu0 %v157
    %601 = vmatprep.subr.mxu0 %v152
    %602 = vmatpush1.msra.mxu0 %v151
    %603 = vmatprep.subr.mxu0 %v146
    %604 = vmatpush1.msra.mxu0 %v145
    %605 = vmatprep.subr.mxu0 %v140
    %606 = vmatpush1.msra.mxu0 %v139
    %607 = vmatprep.subr.mxu0 %v134
    %608 = vmatpush1.msra.mxu0 %v133
    %609 = vmatprep.subr.mxu0 %v128
    %610 = vmatpush1.msra.mxu0 %v127
    %611 = vmatprep.subr.mxu0 %v122
    %612 = vmatpush1.msra.mxu0 %v121
    %613 = vmatprep.subr.mxu0 %v116
    %614 = vmatpush1.msra.mxu0 %v115
    %615 = vmatprep.subr.mxu0 %v110
    %616 = vmatpush1.msra.mxu0 %v109
    %617 = vmatprep.subr.mxu0 %v104
    %618 = vmatpush1.msra.mxu0 %v103
    %619 = vmatprep.subr.mxu0 %v98
    %620 = vmatpush1.msra.mxu0 %v97
    %621 = vmatprep.subr.mxu0 %v92
    %622 = vmatpush1.msra.mxu0 %v91
    %623 = vmatprep.subr.mxu0 %v86
    %624 = vmatpush1.msra.mxu0 %v85
    %625 = vmatprep.subr.mxu0 %v80
    %626 = vmatpush1.msra.mxu0 %v79
    %627 = vmatprep.subr.mxu0 %v74
    %628 = vmatpush1.msra.mxu0 %v73
    %629 = vmatprep.subr.mxu0 %v260
    %630 = vmatpush2.msra.mxu0 %v259
    %631 = vmatprep.subr.mxu0 %v254
    %632 = vmatpush2.msra.mxu0 %v253
    %633 = vmatprep.subr.mxu0 %v248
    %634 = vmatpush2.msra.mxu0 %v247
    %635 = vmatprep.subr.mxu0 %v242
    %636 = vmatpush2.msra.mxu0 %v241
    %637 = vmatprep.subr.mxu0 %v236
    %638 = vmatpush2.msra.mxu0 %v235
    %639 = vmatprep.subr.mxu0 %v230
    %640 = vmatpush2.msra.mxu0 %v229
    %641 = vmatprep.subr.mxu0 %v224
    %642 = vmatpush2.msra.mxu0 %v223
    %643 = vmatprep.subr.mxu0 %v218
    %644 = vmatpush2.msra.mxu0 %v217
    %645 = vmatprep.subr.mxu0 %v212
    %646 = vmatpush2.msra.mxu0 %v211
    %647 = vmatprep.subr.mxu0 %v206
    %648 = vmatpush2.msra.mxu0 %v205
    %649 = vmatprep.subr.mxu0 %v200
    %650 = vmatpush2.msra.mxu0 %v199
    %651 = vmatprep.subr.mxu0 %v194
    %652 = vmatpush2.msra.mxu0 %v193
    %653 = vmatprep.subr.mxu0 %v188
    %654 = vmatpush2.msra.mxu0 %v187
    %655 = vmatprep.subr.mxu0 %v182
    %656 = vmatpush2.msra.mxu0 %v181
    %657 = vmatprep.subr.mxu0 %v176
    %658 = vmatpush2.msra.mxu0 %v175
    %659 = vmatprep.subr.mxu0 %v170
    %660 = vmatpush2.msra.mxu0 %v169
    %661 = vmatprep.mubr.f32.mxu0 %v68
    %662 = vmatmul.mubr.f32.gmra.mxu0 %v67
    %v663 = vpop.f32.mrf.mxu0
    %v664 = vadd.f32 0.0, %v663
    %v665 = vpop.f32.mrf.mxu0
    %v666 = vadd.f32 0.0, %v665
    %667 = vdwg.mxu0
    %668 = vmatprep.subr.mxu0 %v356
    %669 = vmatpush1.msra.mxu0 %v355
    %670 = vmatprep.subr.mxu0 %v350
    %671 = vmatpush1.msra.mxu0 %v349
    %672 = vmatprep.subr.mxu0 %v344
    %673 = vmatpush1.msra.mxu0 %v343
    %674 = vmatprep.subr.mxu0 %v338
    %675 = vmatpush1.msra.mxu0 %v337
    %676 = vmatprep.subr.mxu0 %v332
    %677 = vmatpush1.msra.mxu0 %v331
    %678 = vmatprep.subr.mxu0 %v326
    %679 = vmatpush1.msra.mxu0 %v325
    %680 = vmatprep.subr.mxu0 %v320
    %681 = vmatpush1.msra.mxu0 %v319
    %682 = vmatprep.subr.mxu0 %v314
    %683 = vmatpush1.msra.mxu0 %v313
    %684 = vmatprep.subr.mxu0 %v308
    %685 = vmatpush1.msra.mxu0 %v307
    %686 = vmatprep.subr.mxu0 %v302
    %687 = vmatpush1.msra.mxu0 %v301
    %688 = vmatprep.subr.mxu0 %v296
    %689 = vmatpush1.msra.mxu0 %v295
    %690 = vmatprep.subr.mxu0 %v290
    %691 = vmatpush1.msra.mxu0 %v289
    %692 = vmatprep.subr.mxu0 %v284
    %693 = vmatpush1.msra.mxu0 %v283
    %694 = vmatprep.subr.mxu0 %v278
    %695 = vmatpush1.msra.mxu0 %v277
    %696 = vmatprep.subr.mxu0 %v272
    %697 = vmatpush1.msra.mxu0 %v271
    %698 = vmatprep.subr.mxu0 %v266
    %699 = vmatpush1.msra.mxu0 %v265
    %700 = vmatprep.subr.mxu0 %v452
    %701 = vmatpush2.msra.mxu0 %v451
    %702 = vmatprep.subr.mxu0 %v446
    %703 = vmatpush2.msra.mxu0 %v445
    %704 = vmatprep.subr.mxu0 %v440
    %705 = vmatpush2.msra.mxu0 %v439
    %706 = vmatprep.subr.mxu0 %v434
    %707 = vmatpush2.msra.mxu0 %v433
    %708 = vmatprep.subr.mxu0 %v428
    %709 = vmatpush2.msra.mxu0 %v427
    %710 = vmatprep.subr.mxu0 %v422
    %711 = vmatpush2.msra.mxu0 %v421
    %712 = vmatprep.subr.mxu0 %v416
    %713 = vmatpush2.msra.mxu0 %v415
    %714 = vmatprep.subr.mxu0 %v410
    %715 = vmatpush2.msra.mxu0 %v409
    %716 = vmatprep.subr.mxu0 %v404
    %717 = vmatpush2.msra.mxu0 %v403
    %718 = vmatprep.subr.mxu0 %v398
    %719 = vmatpush2.msra.mxu0 %v397
    %720 = vmatprep.subr.mxu0 %v392
    %721 = vmatpush2.msra.mxu0 %v391
    %722 = vmatprep.subr.mxu0 %v386
    %723 = vmatpush2.msra.mxu0 %v385
    %724 = vmatprep.subr.mxu0 %v380
    %725 = vmatpush2.msra.mxu0 %v379
    %726 = vmatprep.subr.mxu0 %v374
    %727 = vmatpush2.msra.mxu0 %v373
    %728 = vmatprep.subr.mxu0 %v368
    %729 = vmatpush2.msra.mxu0 %v367
    %730 = vmatprep.subr.mxu0 %v362
    %731 = vmatpush2.msra.mxu0 %v361
    %732 = vmatprep.mubr.f32.mxu0 %v70
    %733 = vmatmul.mubr.f32.gmra.mxu0 %v69
    %v734 = vpop.f32.mrf.mxu0
    %v735 = vadd.f32 %v664, %v734
    %v736 = vpop.f32.mrf.mxu0
    %v737 = vadd.f32 %v666, %v736
    %738 = vdwg.mxu0
    %739 = vmatprep.subr.mxu0 %v166
    %740 = vmatpush1.msra.mxu0 %v165
    %741 = vmatprep.subr.mxu0 %v160
    %742 = vmatpush1.msra.mxu0 %v159
    %743 = vmatprep.subr.mxu0 %v154
    %744 = vmatpush1.msra.mxu0 %v153
    %745 = vmatprep.subr.mxu0 %v148
    %746 = vmatpush1.msra.mxu0 %v147
    %747 = vmatprep.subr.mxu0 %v142
    %748 = vmatpush1.msra.mxu0 %v141
    %749 = vmatprep.subr.mxu0 %v136
    %750 = vmatpush1.msra.mxu0 %v135
    %751 = vmatprep.subr.mxu0 %v130
    %752 = vmatpush1.msra.mxu0 %v129
    %753 = vmatprep.subr.mxu0 %v124
    %754 = vmatpush1.msra.mxu0 %v123
    %755 = vmatprep.subr.mxu0 %v118
    %756 = vmatpush1.msra.mxu0 %v117
    %757 = vmatprep.subr.mxu0 %v112
    %758 = vmatpush1.msra.mxu0 %v111
    %759 = vmatprep.subr.mxu0 %v106
    %760 = vmatpush1.msra.mxu0 %v105
    %761 = vmatprep.subr.mxu0 %v100
    %762 = vmatpush1.msra.mxu0 %v99
    %763 = vmatprep.subr.mxu0 %v94
    %764 = vmatpush1.msra.mxu0 %v93
    %765 = vmatprep.subr.mxu0 %v88
    %766 = vmatpush1.msra.mxu0 %v87
    %767 = vmatprep.subr.mxu0 %v82
    %768 = vmatpush1.msra.mxu0 %v81
    %769 = vmatprep.subr.mxu0 %v76
    %770 = vmatpush1.msra.mxu0 %v75
    %771 = vmatprep.subr.mxu0 %v262
    %772 = vmatpush2.msra.mxu0 %v261
    %773 = vmatprep.subr.mxu0 %v256
    %774 = vmatpush2.msra.mxu0 %v255
    %775 = vmatprep.subr.mxu0 %v250
    %776 = vmatpush2.msra.mxu0 %v249
    %777 = vmatprep.subr.mxu0 %v244
    %778 = vmatpush2.msra.mxu0 %v243
    %779 = vmatprep.subr.mxu0 %v238
    %780 = vmatpush2.msra.mxu0 %v237
    %781 = vmatprep.subr.mxu0 %v232
    %782 = vmatpush2.msra.mxu0 %v231
    %783 = vmatprep.subr.mxu0 %v226
    %784 = vmatpush2.msra.mxu0 %v225
    %785 = vmatprep.subr.mxu0 %v220
    %786 = vmatpush2.msra.mxu0 %v219
    %787 = vmatprep.subr.mxu0 %v214
    %788 = vmatpush2.msra.mxu0 %v213
    %789 = vmatprep.subr.mxu0 %v208
    %790 = vmatpush2.msra.mxu0 %v207
    %791 = vmatprep.subr.mxu0 %v202
    %792 = vmatpush2.msra.mxu0 %v201
    %793 = vmatprep.subr.mxu0 %v196
    %794 = vmatpush2.msra.mxu0 %v195
    %795 = vmatprep.subr.mxu0 %v190
    %796 = vmatpush2.msra.mxu0 %v189
    %797 = vmatprep.subr.mxu0 %v184
    %798 = vmatpush2.msra.mxu0 %v183
    %799 = vmatprep.subr.mxu0 %v178
    %800 = vmatpush2.msra.mxu0 %v177
    %801 = vmatprep.subr.mxu0 %v172
    %802 = vmatpush2.msra.mxu0 %v171
    %803 = vmatprep.mubr.f32.mxu0 %v68
    %804 = vmatmul.mubr.f32.gmra.mxu0 %v67
    %v805 = vpop.f32.mrf.mxu0
    %v806 = vadd.f32 0.0, %v805
    %v807 = vpop.f32.mrf.mxu0
    %v808 = vadd.f32 0.0, %v807
    %809 = vdwg.mxu0
    %810 = vmatprep.subr.mxu0 %v358
    %811 = vmatpush1.msra.mxu0 %v357
    %812 = vmatprep.subr.mxu0 %v352
    %813 = vmatpush1.msra.mxu0 %v351
    %814 = vmatprep.subr.mxu0 %v346
    %815 = vmatpush1.msra.mxu0 %v345
    %816 = vmatprep.subr.mxu0 %v340
    %817 = vmatpush1.msra.mxu0 %v339
    %818 = vmatprep.subr.mxu0 %v334
    %819 = vmatpush1.msra.mxu0 %v333
    %820 = vmatprep.subr.mxu0 %v328
    %821 = vmatpush1.msra.mxu0 %v327
    %822 = vmatprep.subr.mxu0 %v322
    %823 = vmatpush1.msra.mxu0 %v321
    %824 = vmatprep.subr.mxu0 %v316
    %825 = vmatpush1.msra.mxu0 %v315
    %826 = vmatprep.subr.mxu0 %v310
    %827 = vmatpush1.msra.mxu0 %v309
    %828 = vmatprep.subr.mxu0 %v304
    %829 = vmatpush1.msra.mxu0 %v303
    %830 = vmatprep.subr.mxu0 %v298
    %831 = vmatpush1.msra.mxu0 %v297
    %832 = vmatprep.subr.mxu0 %v292
    %833 = vmatpush1.msra.mxu0 %v291
    %834 = vmatprep.subr.mxu0 %v286
    %835 = vmatpush1.msra.mxu0 %v285
    %836 = vmatprep.subr.mxu0 %v280
    %837 = vmatpush1.msra.mxu0 %v279
    %838 = vmatprep.subr.mxu0 %v274
    %839 = vmatpush1.msra.mxu0 %v273
    %840 = vmatprep.subr.mxu0 %v268
    %841 = vmatpush1.msra.mxu0 %v267
    %842 = vmatprep.subr.mxu0 %v454
    %843 = vmatpush2.msra.mxu0 %v453
    %844 = vmatprep.subr.mxu0 %v448
    %845 = vmatpush2.msra.mxu0 %v447
    %846 = vmatprep.subr.mxu0 %v442
    %847 = vmatpush2.msra.mxu0 %v441
    %848 = vmatprep.subr.mxu0 %v436
    %849 = vmatpush2.msra.mxu0 %v435
    %850 = vmatprep.subr.mxu0 %v430
    %851 = vmatpush2.msra.mxu0 %v429
    %852 = vmatprep.subr.mxu0 %v424
    %853 = vmatpush2.msra.mxu0 %v423
    %854 = vmatprep.subr.mxu0 %v418
    %855 = vmatpush2.msra.mxu0 %v417
    %856 = vmatprep.subr.mxu0 %v412
    %857 = vmatpush2.msra.mxu0 %v411
    %858 = vmatprep.subr.mxu0 %v406
    %859 = vmatpush2.msra.mxu0 %v405
    %860 = vmatprep.subr.mxu0 %v400
    %861 = vmatpush2.msra.mxu0 %v399
    %862 = vmatprep.subr.mxu0 %v394
    %863 = vmatpush2.msra.mxu0 %v393
    %864 = vmatprep.subr.mxu0 %v388
    %865 = vmatpush2.msra.mxu0 %v387
    %866 = vmatprep.subr.mxu0 %v382
    %867 = vmatpush2.msra.mxu0 %v381
    %868 = vmatprep.subr.mxu0 %v376
    %869 = vmatpush2.msra.mxu0 %v375
    %870 = vmatprep.subr.mxu0 %v370
    %871 = vmatpush2.msra.mxu0 %v369
    %872 = vmatprep.subr.mxu0 %v364
    %873 = vmatpush2.msra.mxu0 %v363
    %874 = vmatprep.mubr.f32.mxu0 %v70
    %875 = vmatmul.mubr.f32.gmra.mxu0 %v69
    %v876 = vpop.f32.mrf.mxu0
    %v877 = vadd.f32 %v806, %v876
    %v878 = vpop.f32.mrf.mxu0
    %v879 = vadd.f32 %v808, %v878
    %880 = vdwg.mxu0
    %v881 = vmul.f32 %v593, %v593
    %v882 = vmul.f32 %v595, %v595
    %v883 = vmul.f32 %v735, %v735
    %v884 = vmul.f32 %v737, %v737
    %v885 = vmul.f32 %v877, %v877
    %v886 = vmul.f32 %v879, %v879
    %v887 = vld [vmem:[#allocation7] sm:$0xff]
    %v888 = vld [vmem:[#allocation7 + $0x8] sm:$0xff]
    %v889 = vld [vmem:[#allocation7 + $0x10] sm:$0xff]
    %v890 = vld [vmem:[#allocation7 + $0x18] sm:$0xff]
    %v891 = vld [vmem:[#allocation7 + $0x20] sm:$0xff]
    %v892 = vld [vmem:[#allocation7 + $0x28] sm:$0xff]
    %v893 = vld [vmem:[#allocation7 + $0x30] sm:$0xff]
    %v894 = vld [vmem:[#allocation7 + $0x38] sm:$0xff]
    %v895 = vld [vmem:[#allocation7 + $0x40] sm:$0xff]
    %v896 = vld [vmem:[#allocation7 + $0x48] sm:$0xff]
    %v897 = vld [vmem:[#allocation7 + $0x50] sm:$0xff]
    %v898 = vld [vmem:[#allocation7 + $0x58] sm:$0xff]
    %v899 = vld [vmem:[#allocation7 + $0x60] sm:$0xff]
    %v900 = vld [vmem:[#allocation7 + $0x68] sm:$0xff]
    %v901 = vld [vmem:[#allocation7 + $0x70] sm:$0xff]
    %v902 = vld [vmem:[#allocation7 + $0x78] sm:$0xff]
    %v903 = vld [vmem:[#allocation7 + $0x80] sm:$0xff]
    %v904 = vld [vmem:[#allocation7 + $0x88] sm:$0xff]
    %v905 = vld [vmem:[#allocation7 + $0x90] sm:$0xff]
    %v906 = vld [vmem:[#allocation7 + $0x98] sm:$0xff]
    %v907 = vld [vmem:[#allocation7 + $0xa0] sm:$0xff]
    %v908 = vld [vmem:[#allocation7 + $0xa8] sm:$0xff]
    %v909 = vld [vmem:[#allocation7 + $0xb0] sm:$0xff]
    %v910 = vld [vmem:[#allocation7 + $0xb8] sm:$0xff]
    %v911 = vld [vmem:[#allocation7 + $0xc0] sm:$0xff]
    %v912 = vld [vmem:[#allocation7 + $0xc8] sm:$0xff]
    %v913 = vld [vmem:[#allocation7 + $0xd0] sm:$0xff]
    %v914 = vld [vmem:[#allocation7 + $0xd8] sm:$0xff]
    %v915 = vld [vmem:[#allocation7 + $0xe0] sm:$0xff]
    %v916 = vld [vmem:[#allocation7 + $0xe8] sm:$0xff]
    %v917 = vld [vmem:[#allocation7 + $0xf0] sm:$0xff]
    %v918 = vld [vmem:[#allocation7 + $0xf8] sm:$0xff]
    %v919 = vld [vmem:[#allocation7 + $0x100] sm:$0xff]
    %v920 = vld [vmem:[#allocation7 + $0x108] sm:$0xff]
    %v921 = vld [vmem:[#allocation7 + $0x110] sm:$0xff]
    %v922 = vld [vmem:[#allocation7 + $0x118] sm:$0xff]
    %v923 = vld [vmem:[#allocation7 + $0x120] sm:$0xff]
    %v924 = vld [vmem:[#allocation7 + $0x128] sm:$0xff]
    %v925 = vld [vmem:[#allocation7 + $0x130] sm:$0xff]
    %v926 = vld [vmem:[#allocation7 + $0x138] sm:$0xff]
    %v927 = vld [vmem:[#allocation7 + $0x140] sm:$0xff]
    %v928 = vld [vmem:[#allocation7 + $0x148] sm:$0xff]
    %v929 = vld [vmem:[#allocation7 + $0x150] sm:$0xff]
    %v930 = vld [vmem:[#allocation7 + $0x158] sm:$0xff]
    %v931 = vld [vmem:[#allocation7 + $0x160] sm:$0xff]
    %v932 = vld [vmem:[#allocation7 + $0x168] sm:$0xff]
    %v933 = vld [vmem:[#allocation7 + $0x170] sm:$0xff]
    %v934 = vld [vmem:[#allocation7 + $0x178] sm:$0xff]
    %v935 = vld [vmem:[#allocation7 + $0x180] sm:$0xff]
    %v936 = vld [vmem:[#allocation7 + $0x188] sm:$0xff]
    %v937 = vld [vmem:[#allocation7 + $0x190] sm:$0xff]
    %v938 = vld [vmem:[#allocation7 + $0x198] sm:$0xff]
    %v939 = vld [vmem:[#allocation7 + $0x1a0] sm:$0xff]
    %v940 = vld [vmem:[#allocation7 + $0x1a8] sm:$0xff]
    %v941 = vld [vmem:[#allocation7 + $0x1b0] sm:$0xff]
    %v942 = vld [vmem:[#allocation7 + $0x1b8] sm:$0xff]
    %v943 = vld [vmem:[#allocation7 + $0x1c0] sm:$0xff]
    %v944 = vld [vmem:[#allocation7 + $0x1c8] sm:$0xff]
    %v945 = vld [vmem:[#allocation7 + $0x1d0] sm:$0xff]
    %v946 = vld [vmem:[#allocation7 + $0x1d8] sm:$0xff]
    %v947 = vld [vmem:[#allocation7 + $0x1e0] sm:$0xff]
    %v948 = vld [vmem:[#allocation7 + $0x1e8] sm:$0xff]
    %v949 = vld [vmem:[#allocation7 + $0x1f0] sm:$0xff]
    %v950 = vld [vmem:[#allocation7 + $0x1f8] sm:$0xff]
    %v951 = vld [vmem:[#allocation7 + $0x200] sm:$0xff]
    %v952 = vld [vmem:[#allocation7 + $0x208] sm:$0xff]
    %v953 = vld [vmem:[#allocation7 + $0x210] sm:$0xff]
    %v954 = vld [vmem:[#allocation7 + $0x218] sm:$0xff]
    %v955 = vld [vmem:[#allocation7 + $0x220] sm:$0xff]
    %v956 = vld [vmem:[#allocation7 + $0x228] sm:$0xff]
    %v957 = vld [vmem:[#allocation7 + $0x230] sm:$0xff]
    %v958 = vld [vmem:[#allocation7 + $0x238] sm:$0xff]
    %v959 = vld [vmem:[#allocation7 + $0x240] sm:$0xff]
    %v960 = vld [vmem:[#allocation7 + $0x248] sm:$0xff]
    %v961 = vld [vmem:[#allocation7 + $0x250] sm:$0xff]
    %v962 = vld [vmem:[#allocation7 + $0x258] sm:$0xff]
    %v963 = vld [vmem:[#allocation7 + $0x260] sm:$0xff]
    %v964 = vld [vmem:[#allocation7 + $0x268] sm:$0xff]
    %v965 = vld [vmem:[#allocation7 + $0x270] sm:$0xff]
    %v966 = vld [vmem:[#allocation7 + $0x278] sm:$0xff]
    %v967 = vld [vmem:[#allocation7 + $0x280] sm:$0xff]
    %v968 = vld [vmem:[#allocation7 + $0x288] sm:$0xff]
    %v969 = vld [vmem:[#allocation7 + $0x290] sm:$0xff]
    %v970 = vld [vmem:[#allocation7 + $0x298] sm:$0xff]
    %v971 = vld [vmem:[#allocation7 + $0x2a0] sm:$0xff]
    %v972 = vld [vmem:[#allocation7 + $0x2a8] sm:$0xff]
    %v973 = vld [vmem:[#allocation7 + $0x2b0] sm:$0xff]
    %v974 = vld [vmem:[#allocation7 + $0x2b8] sm:$0xff]
    %v975 = vld [vmem:[#allocation7 + $0x2c0] sm:$0xff]
    %v976 = vld [vmem:[#allocation7 + $0x2c8] sm:$0xff]
    %v977 = vld [vmem:[#allocation7 + $0x2d0] sm:$0xff]
    %v978 = vld [vmem:[#allocation7 + $0x2d8] sm:$0xff]
    %v979 = vld [vmem:[#allocation7 + $0x2e0] sm:$0xff]
    %v980 = vld [vmem:[#allocation7 + $0x2e8] sm:$0xff]
    %v981 = vld [vmem:[#allocation7 + $0x2f0] sm:$0xff]
    %v982 = vld [vmem:[#allocation7 + $0x2f8] sm:$0xff]
    %983 = vmatprep.subr.mxu0 0.0
    %984 = vmatpush1.msra.mxu0 %v902
    %985 = vmatprep.subr.mxu0 0.0
    %986 = vmatpush1.msra.mxu0 %v901
    %987 = vmatprep.subr.mxu0 0.0
    %988 = vmatpush1.msra.mxu0 %v900
    %989 = vmatprep.subr.mxu0 0.0
    %990 = vmatpush1.msra.mxu0 %v899
    %991 = vmatprep.subr.mxu0 0.0
    %992 = vmatpush1.msra.mxu0 %v898
    %993 = vmatprep.subr.mxu0 0.0
    %994 = vmatpush1.msra.mxu0 %v897
    %995 = vmatprep.subr.mxu0 0.0
    %996 = vmatpush1.msra.mxu0 %v896
    %997 = vmatprep.subr.mxu0 0.0
    %998 = vmatpush1.msra.mxu0 %v895
    %999 = vmatprep.subr.mxu0 0.0
    %1000 = vmatpush1.msra.mxu0 %v894
    %1001 = vmatprep.subr.mxu0 0.0
    %1002 = vmatpush1.msra.mxu0 %v893
    %1003 = vmatprep.subr.mxu0 0.0
    %1004 = vmatpush1.msra.mxu0 %v892
    %1005 = vmatprep.subr.mxu0 0.0
    %1006 = vmatpush1.msra.mxu0 %v891
    %1007 = vmatprep.subr.mxu0 0.0
    %1008 = vmatpush1.msra.mxu0 %v890
    %1009 = vmatprep.subr.mxu0 0.0
    %1010 = vmatpush1.msra.mxu0 %v889
    %1011 = vmatprep.subr.mxu0 0.0
    %1012 = vmatpush1.msra.mxu0 %v888
    %1013 = vmatprep.subr.mxu0 0.0
    %1014 = vmatpush1.msra.mxu0 %v887
    %1015 = vmatprep.subr.mxu0 0.0
    %1016 = vmatpush2.msra.mxu0 %v918
    %1017 = vmatprep.subr.mxu0 0.0
    %1018 = vmatpush2.msra.mxu0 %v917
    %1019 = vmatprep.subr.mxu0 0.0
    %1020 = vmatpush2.msra.mxu0 %v916
    %1021 = vmatprep.subr.mxu0 0.0
    %1022 = vmatpush2.msra.mxu0 %v915
    %1023 = vmatprep.subr.mxu0 0.0
    %1024 = vmatpush2.msra.mxu0 %v914
    %1025 = vmatprep.subr.mxu0 0.0
    %1026 = vmatpush2.msra.mxu0 %v913
    %1027 = vmatprep.subr.mxu0 0.0
    %1028 = vmatpush2.msra.mxu0 %v912
    %1029 = vmatprep.subr.mxu0 0.0
    %1030 = vmatpush2.msra.mxu0 %v911
    %1031 = vmatprep.subr.mxu0 0.0
    %1032 = vmatpush2.msra.mxu0 %v910
    %1033 = vmatprep.subr.mxu0 0.0
    %1034 = vmatpush2.msra.mxu0 %v909
    %1035 = vmatprep.subr.mxu0 0.0
    %1036 = vmatpush2.msra.mxu0 %v908
    %1037 = vmatprep.subr.mxu0 0.0
    %1038 = vmatpush2.msra.mxu0 %v907
    %1039 = vmatprep.subr.mxu0 0.0
    %1040 = vmatpush2.msra.mxu0 %v906
    %1041 = vmatprep.subr.mxu0 0.0
    %1042 = vmatpush2.msra.mxu0 %v905
    %1043 = vmatprep.subr.mxu0 0.0
    %1044 = vmatpush2.msra.mxu0 %v904
    %1045 = vmatprep.subr.mxu0 0.0
    %1046 = vmatpush2.msra.mxu0 %v903
    %1047 = vmatprep.mubr.f32.mxu0 %v882
    %1048 = vmatmul.mubr.f32.gmra.mxu0 %v881
    %v1049 = vpop.f32.mrf.mxu0
    %v1050 = vadd.f32 0.0, %v1049
    %v1051 = vpop.f32.mrf.mxu0
    %1052 = vdwg.mxu0
    %1053 = vmatprep.subr.mxu0 0.0
    %1054 = vmatpush1.msra.mxu0 %v934
    %1055 = vmatprep.subr.mxu0 0.0
    %1056 = vmatpush1.msra.mxu0 %v933
    %1057 = vmatprep.subr.mxu0 0.0
    %1058 = vmatpush1.msra.mxu0 %v932
    %1059 = vmatprep.subr.mxu0 0.0
    %1060 = vmatpush1.msra.mxu0 %v931
    %1061 = vmatprep.subr.mxu0 0.0
    %1062 = vmatpush1.msra.mxu0 %v930
    %1063 = vmatprep.subr.mxu0 0.0
    %1064 = vmatpush1.msra.mxu0 %v929
    %1065 = vmatprep.subr.mxu0 0.0
    %1066 = vmatpush1.msra.mxu0 %v928
    %1067 = vmatprep.subr.mxu0 0.0
    %1068 = vmatpush1.msra.mxu0 %v927
    %1069 = vmatprep.subr.mxu0 0.0
    %1070 = vmatpush1.msra.mxu0 %v926
    %1071 = vmatprep.subr.mxu0 0.0
    %1072 = vmatpush1.msra.mxu0 %v925
    %1073 = vmatprep.subr.mxu0 0.0
    %1074 = vmatpush1.msra.mxu0 %v924
    %1075 = vmatprep.subr.mxu0 0.0
    %1076 = vmatpush1.msra.mxu0 %v923
    %1077 = vmatprep.subr.mxu0 0.0
    %1078 = vmatpush1.msra.mxu0 %v922
    %1079 = vmatprep.subr.mxu0 0.0
    %1080 = vmatpush1.msra.mxu0 %v921
    %1081 = vmatprep.subr.mxu0 0.0
    %1082 = vmatpush1.msra.mxu0 %v920
    %1083 = vmatprep.subr.mxu0 0.0
    %1084 = vmatpush1.msra.mxu0 %v919
    %1085 = vmatprep.subr.mxu0 0.0
    %1086 = vmatpush2.msra.mxu0 %v950
    %1087 = vmatprep.subr.mxu0 0.0
    %1088 = vmatpush2.msra.mxu0 %v949
    %1089 = vmatprep.subr.mxu0 0.0
    %1090 = vmatpush2.msra.mxu0 %v948
    %1091 = vmatprep.subr.mxu0 0.0
    %1092 = vmatpush2.msra.mxu0 %v947
    %1093 = vmatprep.subr.mxu0 0.0
    %1094 = vmatpush2.msra.mxu0 %v946
    %1095 = vmatprep.subr.mxu0 0.0
    %1096 = vmatpush2.msra.mxu0 %v945
    %1097 = vmatprep.subr.mxu0 0.0
    %1098 = vmatpush2.msra.mxu0 %v944
    %1099 = vmatprep.subr.mxu0 0.0
    %1100 = vmatpush2.msra.mxu0 %v943
    %1101 = vmatprep.subr.mxu0 0.0
    %1102 = vmatpush2.msra.mxu0 %v942
    %1103 = vmatprep.subr.mxu0 0.0
    %1104 = vmatpush2.msra.mxu0 %v941
    %1105 = vmatprep.subr.mxu0 0.0
    %1106 = vmatpush2.msra.mxu0 %v940
    %1107 = vmatprep.subr.mxu0 0.0
    %1108 = vmatpush2.msra.mxu0 %v939
    %1109 = vmatprep.subr.mxu0 0.0
    %1110 = vmatpush2.msra.mxu0 %v938
    %1111 = vmatprep.subr.mxu0 0.0
    %1112 = vmatpush2.msra.mxu0 %v937
    %1113 = vmatprep.subr.mxu0 0.0
    %1114 = vmatpush2.msra.mxu0 %v936
    %1115 = vmatprep.subr.mxu0 0.0
    %1116 = vmatpush2.msra.mxu0 %v935
    %1117 = vmatprep.mubr.f32.mxu0 %v884
    %1118 = vmatmul.mubr.f32.gmra.mxu0 %v883
    %v1119 = vpop.f32.mrf.mxu0
    %v1120 = vadd.f32 %v1050, %v1119
    %v1121 = vpop.f32.mrf.mxu0
    %1122 = vdwg.mxu0
    %1123 = vmatprep.subr.mxu0 0.0
    %1124 = vmatpush1.msra.mxu0 %v966
    %1125 = vmatprep.subr.mxu0 0.0
    %1126 = vmatpush1.msra.mxu0 %v965
    %1127 = vmatprep.subr.mxu0 0.0
    %1128 = vmatpush1.msra.mxu0 %v964
    %1129 = vmatprep.subr.mxu0 0.0
    %1130 = vmatpush1.msra.mxu0 %v963
    %1131 = vmatprep.subr.mxu0 0.0
    %1132 = vmatpush1.msra.mxu0 %v962
    %1133 = vmatprep.subr.mxu0 0.0
    %1134 = vmatpush1.msra.mxu0 %v961
    %1135 = vmatprep.subr.mxu0 0.0
    %1136 = vmatpush1.msra.mxu0 %v960
    %1137 = vmatprep.subr.mxu0 0.0
    %1138 = vmatpush1.msra.mxu0 %v959
    %1139 = vmatprep.subr.mxu0 0.0
    %1140 = vmatpush1.msra.mxu0 %v958
    %1141 = vmatprep.subr.mxu0 0.0
    %1142 = vmatpush1.msra.mxu0 %v957
    %1143 = vmatprep.subr.mxu0 0.0
    %1144 = vmatpush1.msra.mxu0 %v956
    %1145 = vmatprep.subr.mxu0 0.0
    %1146 = vmatpush1.msra.mxu0 %v955
    %1147 = vmatprep.subr.mxu0 0.0
    %1148 = vmatpush1.msra.mxu0 %v954
    %1149 = vmatprep.subr.mxu0 0.0
    %1150 = vmatpush1.msra.mxu0 %v953
    %1151 = vmatprep.subr.mxu0 0.0
    %1152 = vmatpush1.msra.mxu0 %v952
    %1153 = vmatprep.subr.mxu0 0.0
    %1154 = vmatpush1.msra.mxu0 %v951
    %1155 = vmatprep.subr.mxu0 0.0
    %1156 = vmatpush2.msra.mxu0 %v982
    %1157 = vmatprep.subr.mxu0 0.0
    %1158 = vmatpush2.msra.mxu0 %v981
    %1159 = vmatprep.subr.mxu0 0.0
    %1160 = vmatpush2.msra.mxu0 %v980
    %1161 = vmatprep.subr.mxu0 0.0
    %1162 = vmatpush2.msra.mxu0 %v979
    %1163 = vmatprep.subr.mxu0 0.0
    %1164 = vmatpush2.msra.mxu0 %v978
    %1165 = vmatprep.subr.mxu0 0.0
    %1166 = vmatpush2.msra.mxu0 %v977
    %1167 = vmatprep.subr.mxu0 0.0
    %1168 = vmatpush2.msra.mxu0 %v976
    %1169 = vmatprep.subr.mxu0 0.0
    %1170 = vmatpush2.msra.mxu0 %v975
    %1171 = vmatprep.subr.mxu0 0.0
    %1172 = vmatpush2.msra.mxu0 %v974
    %1173 = vmatprep.subr.mxu0 0.0
    %1174 = vmatpush2.msra.mxu0 %v973
    %1175 = vmatprep.subr.mxu0 0.0
    %1176 = vmatpush2.msra.mxu0 %v972
    %1177 = vmatprep.subr.mxu0 0.0
    %1178 = vmatpush2.msra.mxu0 %v971
    %1179 = vmatprep.subr.mxu0 0.0
    %1180 = vmatpush2.msra.mxu0 %v970
    %1181 = vmatprep.subr.mxu0 0.0
    %1182 = vmatpush2.msra.mxu0 %v969
    %1183 = vmatprep.subr.mxu0 0.0
    %1184 = vmatpush2.msra.mxu0 %v968
    %1185 = vmatprep.subr.mxu0 0.0
    %1186 = vmatpush2.msra.mxu0 %v967
    %1187 = vmatprep.mubr.f32.mxu0 %v886
    %1188 = vmatmul.mubr.f32.gmra.mxu0 %v885
    %v1189 = vpop.f32.mrf.mxu0
    %v1190 = vadd.f32 %v1120, %v1189
    %v1191 = vpop.f32.mrf.mxu0
    %1192 = vdwg.mxu0
    %v1193 = vmax.f32 %v1190, 1.1920929e-07
    %v1194 = vlog2.pop %v1193
    %v1195 = vmul.f32 %v1194, 0.6931472
    %1196 = vst [vmem:[#allocation8] sm:$0xff] %v1195
    %s1197 = smul.u32 0, 8
    %v1198 = vlaneseq
    %v1199 = vshrl.u32 %v1198, 7
    %v1200 = vstv %s1197
    %v1201 = vadd.s32 %v1200, %v1199
    %vm1202 = vcmp.lt.s32.totalorder %v1201, 8
    %v1203 = vsel %vm1202, 1, 0
    %vm1204 = vcmp.eq.s32.totalorder %v1203, 1
    %v1205 = vsel %vm1204, %v1195, 0.0
    %v1206 = vrot.slane %v1205, 4
    %v1207 = vadd.f32 %v1205, %v1206
    %v1208 = vrot.slane %v1207, 2
    %v1209 = vadd.f32 %v1207, %v1208
    %v1210 = vrot.slane %v1209, 1
    %v1211 = vadd.f32 %v1209, %v1210
    %v1212 = vmul.f32 %v1205, %v1205
    %v1213 = vrot.slane %v1212, 4
    %v1214 = vadd.f32 %v1212, %v1213
    %v1215 = vrot.slane %v1214, 2
    %v1216 = vadd.f32 %v1214, %v1215
    %v1217 = vrot.slane %v1216, 1
    %v1218 = vadd.f32 %v1216, %v1217
    %vm1219 = vcmask 1040384
    %v1220 = vsel %vm1219, %v1211, %v1218
    %vm1221 = vcmask 1041408
    %v1222 = vsel %vm1221, %v1220, 0.0
    %1223 = vst [vmem:[#allocation9] sm:$0xff] %v1222
    // Predicated region
    $region26: #{tpu_custom_call.1} parent=1 // pred_check
      _
    $region27: #{tpu_custom_call.1} parent=1 // pred_check_branch
      %1225 = sbr.rel (0) target = $region29
    $region28: #{tpu_custom_call.1} parent=1 // pred_region
      %s1227 = ssub.s32 128, 128
      %1228 = vsyncadd [#allocation4], %s1227
      %s1230 = sshll.u32 [#allocation8], 4
      %s1231 = int_to_ptr.vmem [resolvable:$true] %s1230
      %1233 = dma.vmem_to_hbm [thread:$0]  %s1231, 128, %s3, [#allocation4]
    $region29: #{tpu_custom_call.1} parent=1 // pred_fallthru
      _
    // Predicated region
    $region30: #{tpu_custom_call.1} parent=1 // pred_check
      _
    $region31: #{tpu_custom_call.1} parent=1 // pred_check_branch
      %1235 = sbr.rel (0) target = $region33
    $region32: #{tpu_custom_call.1} parent=1 // pred_region
      %s1237 = ssub.s32 128, 128
      %1238 = vsyncadd [#allocation10], %s1237
      %s1240 = sshll.u32 [#allocation9], 4
      %s1241 = int_to_ptr.vmem [resolvable:$true] %s1240
      %1243 = dma.vmem_to_hbm [thread:$0]  %s1241, 128, %s4, [#allocation10]
    $region33: #{tpu_custom_call.1} parent=1 // pred_fallthru
      _
    // Predicated region
    $region34: #{tpu_custom_call.1} parent=1 // pred_check
      _
    $region35: #{tpu_custom_call.1} parent=1 // pred_check_branch
      %1245 = sbr.rel (0) target = $region37
    $region36: #{tpu_custom_call.1} parent=1 // pred_region
      %1246 = dma.done [#allocation4], 128
    $region37: #{tpu_custom_call.1} parent=1 // pred_fallthru
      _
    // Predicated region
    $region38: #{tpu_custom_call.1} parent=1 // pred_check
      _
    $region39: #{tpu_custom_call.1} parent=1 // pred_check_branch
      %1248 = sbr.rel (0) target = $region41
    $region40: #{tpu_custom_call.1} parent=1 // pred_region
      %1249 = dma.done [#allocation10], 128
    $region41: #{tpu_custom_call.1} parent=1 // pred_fallthru
      _
    %1250 = vsyncpa [#allocation3], 1
    %1251 = vsyncpa [#allocation6], 1
    %1252 = vsyncpa [#allocation4], 1
    %1253 = vsyncpa [#allocation10], 1

</llo_original>
